<compile_context>
chip_gen: v5e
topology: v5e:2x2
jax: 0.10.0
libtpu: 0.0.40
codegen_flags: <defaults>
</compile_context>

<pallas_src>
import functools

import jax
import jax.numpy as jnp
from jax import lax
from jax.experimental import pallas as pl
from jax.experimental.pallas import tpu as pltpu


def _flash_attention_kernel(q_ref, k_ref, v_ref, x_ref, ca_ref, gamma_ref,
                            out_ref, m_sc, l_sc, acc_sc):
    ki = pl.program_id(2)
    nk = pl.num_programs(2)

    # ---- per-(b, qi) init: reset online-softmax accumulators --------------
    @pl.when(ki == 0)
    def _init():
        m_sc[...] = jnp.full_like(m_sc[...], -jnp.inf)
        l_sc[...] = jnp.zeros_like(l_sc[...])
        acc_sc[...] = jnp.zeros_like(acc_sc[...])

    q = q_ref[0]                         # (C8, TQ) bf16
    k = k_ref[0]                         # (C8, TK) bf16
    v = v_ref[0]                         # (C,  TK) bf16

    # energy tile in (key, query) layout: s[j, i] = sum_c k[c, j] * q[c, i]
    s = lax.dot_general(k, q, (((0,), (0,)), ((), ())),
                        preferred_element_type=jnp.float32)          # (TK, TQ)

    # ---- online softmax (stats kept as (1, TQ) rows -> lane broadcasts) ---
    m_prev = m_sc[...]
    m_new = jnp.maximum(m_prev, jnp.max(s, axis=0, keepdims=True))   # (1, TQ)
    alpha = jnp.exp(m_prev - m_new)                                  # (1, TQ)
    p = jnp.exp(s - m_new)                                           # (TK, TQ)
    l_sc[...] = alpha * l_sc[...] + jnp.sum(p, axis=0, keepdims=True)
    acc_sc[...] = alpha * acc_sc[...] + jnp.dot(
        v, p.astype(jnp.bfloat16), preferred_element_type=jnp.float32)  # (C, TQ)
    m_sc[...] = m_new

    # ---- epilogue: normalize, channel-attention gate, gamma residual ------
    @pl.when(ki == nk - 1)
    def _finalize():
        inv_l = 1.0 / l_sc[...]                                      # exact, once per qi
        attn_out = acc_sc[...] * inv_l                               # (C, TQ)
        out_ref[0] = gamma_ref[0] * (attn_out * ca_ref[0]) + x_ref[0]


def self_attention_pallas(x_nchw, params, *, tq=256, tk=256):
    B, C, H, W = x_nchw.shape
    N = H * W
    C8 = C // 8
    wq, bq, wk, bk, wv, bv, w1, w2, gamma = params

    tq = min(tq, N)
    tk = min(tk, N)
    assert N % tq == 0 and N % tk == 0, "spatial size must tile evenly"
    nq, nk = N // tq, N // tk

    x = x_nchw.reshape(B, C, N).astype(jnp.float32)

    # ---- one-time projections (XLA, f32 accuracy), cast to bf16 for kernel --
    q = (jnp.einsum('oc,bcn->bon', wq, x) + bq[None]).astype(jnp.bfloat16)  # (B, C8, N)
    k = (jnp.einsum('oc,bcn->bon', wk, x) + bk[None]).astype(jnp.bfloat16)  # (B, C8, N)
    v = (jnp.einsum('oc,bcn->bon', wv, x) + bv[None]).astype(jnp.bfloat16)  # (B, C,  N)

    # ---- channel attention hoisted out of the kernel (f32, tiny) -----------
    pooled = jnp.mean(x, axis=2, keepdims=True)                       # (B, C, 1)
    hidden = jax.nn.relu(jnp.einsum('oc,bcx->box', w1, pooled))       # (B, C16, 1)
    ca = jax.nn.sigmoid(jnp.einsum('oc,bcx->box', w2, hidden))        # (B, C, 1)

    gamma_s = gamma.reshape(1).astype(jnp.float32)                    # SMEM scalar

    out = pl.pallas_call(
        _flash_attention_kernel,
        out_shape=jax.ShapeDtypeStruct((B, C, N), jnp.float32),
        grid_spec=pltpu.PrefetchScalarGridSpec(
            num_scalar_prefetch=0,
            grid=(B, nq, nk),
            in_specs=[
                pl.BlockSpec((1, C8, tq), lambda b, qi, ki: (b, 0, qi)),  # Q (bf16)
                pl.BlockSpec((1, C8, tk), lambda b, qi, ki: (b, 0, ki)),  # K (bf16)
                pl.BlockSpec((1, C, tk), lambda b, qi, ki: (b, 0, ki)),   # V (bf16)
                pl.BlockSpec((1, C, tq), lambda b, qi, ki: (b, 0, qi)),   # x (residual, f32)
                pl.BlockSpec((1, C, 1), lambda b, qi, ki: (b, 0, 0)),     # channel attn gate
                pl.BlockSpec(memory_space=pltpu.MemorySpace.SMEM),        # gamma (scalar)
            ],
            out_specs=pl.BlockSpec((1, C, tq), lambda b, qi, ki: (b, 0, qi)),
            scratch_shapes=[
                pltpu.VMEM((1, tq), jnp.float32),    # running max
                pltpu.VMEM((1, tq), jnp.float32),    # running denom
                pltpu.VMEM((C, tq), jnp.float32),    # output accumulator
            ],
        ),
        compiler_params=pltpu.CompilerParams(
            dimension_semantics=("parallel", "parallel", "arbitrary"),
            vmem_limit_bytes=48 * 1024 * 1024,
        ),
    )(q, k, v, x, ca, gamma_s)

    return out.reshape(B, C, H, W)


def self_attention_ref(x_nchw, params):
    """Pure-JAX reference mirroring the PyTorch forward (f32)."""
    wq, bq, wk, bk, wv, bv, w1, w2, gamma = params
    B, C, H, W = x_nchw.shape
    N = H * W
    x = x_nchw.reshape(B, C, N)
    q = jnp.einsum('oc,bcn->bon', wq, x) + bq[None]
    k = jnp.einsum('oc,bcn->bon', wk, x) + bk[None]
    v = jnp.einsum('oc,bcn->bon', wv, x) + bv[None]
    energy = jnp.einsum('bci,bcj->bij', q, k)
    attn = jax.nn.softmax(energy, axis=-1)
    out = jnp.einsum('bcj,bij->bci', v, attn)
    pooled = jnp.mean(x, axis=2, keepdims=True)
    hidden = jax.nn.relu(jnp.einsum('oc,bcx->box', w1, pooled))
    ca = jax.nn.sigmoid(jnp.einsum('oc,bcx->box', w2, hidden))
    out = out * ca
    out = gamma[0] * out + x
    return out.reshape(B, C, H, W)


def make_params(key, C):
    C8, C16 = C // 8, C // 16
    ks = jax.random.split(key, 8)
    wq = jax.random.normal(ks[0], (C8, C), jnp.float32) * 0.1
    bq = jax.random.normal(ks[1], (C8, 1), jnp.float32) * 0.1
    wk = jax.random.normal(ks[2], (C8, C), jnp.float32) * 0.1
    bk = jax.random.normal(ks[3], (C8, 1), jnp.float32) * 0.1
    wv = jax.random.normal(ks[4], (C, C), jnp.float32) * 0.1
    bv = jax.random.normal(ks[5], (C, 1), jnp.float32) * 0.1
    w1 = jax.random.normal(ks[6], (C16, C), jnp.float32) * 0.1
    w2 = jax.random.normal(ks[7], (C, C16), jnp.float32) * 0.1
    # torch init is gamma = 0 (identity); use a nonzero value so the attention
    # path is actually exercised, still deterministic.
    gamma = jnp.full((1,), 0.5, jnp.float32)
    return (wq, bq, wk, bk, wv, bv, w1, w2, gamma)


if __name__ == "__main__":
    key = jax.random.PRNGKey(0)
    k_x, k_p = jax.random.split(key)

    # C//8 = 4, C//16 = 2, N = 256 (single lane-dense 256-wide tile per axis).
    B, C, H, W = 2, 32, 16, 16
    x = jax.random.normal(k_x, (B, C, H, W), jnp.float32)
    params = make_params(k_p, C)

    out = self_attention_pallas(x, params)
    out = jax.block_until_ready(out)

    ref = self_attention_ref(x, params)
    assert out.shape == (B, C, H, W)
    # bf16 Q/K/V/probability operands (f32 accumulation) => loosened tolerance.
    assert jnp.allclose(out, ref, atol=2e-2, rtol=2e-2), "mismatch vs reference"

    print("KERNEL_OK")
</pallas_src>

<mosaic_0001>
module attributes {stable_mosaic.version = 11 : i64} {
  func.func @_flash_attention_kernel(%arg0: i32, %arg1: i32, %arg2: i32, %arg3: memref<1x4x256xbf16, #tpu.memory_space<vmem>>, %arg4: memref<1x4x256xbf16, #tpu.memory_space<vmem>>, %arg5: memref<1x32x256xbf16, #tpu.memory_space<vmem>>, %arg6: memref<1x32x256xf32, #tpu.memory_space<vmem>>, %arg7: memref<1x32x1xf32, #tpu.memory_space<vmem>>, %arg8: memref<1xf32, #tpu.memory_space<smem>>, %arg9: memref<1x32x256xf32, #tpu.memory_space<vmem>>, %arg10: memref<1x256xf32, #tpu.memory_space<vmem>>, %arg11: memref<1x256xf32, #tpu.memory_space<vmem>>, %arg12: memref<32x256xf32, #tpu.memory_space<vmem>>) attributes {dimension_semantics = [#tpu.dimension_semantics<parallel>, #tpu.dimension_semantics<parallel>, #tpu.dimension_semantics<arbitrary>], iteration_bounds = array<i64: 2, 1, 1>, scalar_prefetch = 0 : i64, scratch_operands = 3 : i64, tpu.core_type = #tpu.core_type<tc>, window_params = [{transform_indices = @transform_0, window_bounds = array<i64: 1, 4, 256>}, {transform_indices = @transform_1, window_bounds = array<i64: 1, 4, 256>}, {transform_indices = @transform_2, window_bounds = array<i64: 1, 32, 256>}, {transform_indices = @transform_3, window_bounds = array<i64: 1, 32, 256>}, {transform_indices = @transform_4, window_bounds = array<i64: 1, 32, 1>}, {transform_indices = @transform_5, window_bounds = array<i64: 1>}, {transform_indices = @transform_6, window_bounds = array<i64: 1, 32, 256>}]} {
    %c0_i32 = arith.constant 0 : i32
    %0 = arith.cmpi eq, %arg2, %c0_i32 : i32
    %1 = arith.extui %0 : i1 to i32
    %c0_i32_0 = arith.constant 0 : i32
    %2 = arith.cmpi ne, %1, %c0_i32_0 : i32
    scf.if %2 {
      %cst_26 = arith.constant 0xFF800000 : f32
      %36 = vector.broadcast %cst_26 : f32 to vector<1x256xf32>
      %c0_27 = arith.constant 0 : index
      %c0_28 = arith.constant 0 : index
      %37 = vector.load %arg10[%c0_27, %c0_28] : memref<1x256xf32, #tpu.memory_space<vmem>>, vector<1x256xf32>
      tpu.vector_store %arg10[%c0_27, %c0_28], %36 {strides = array<i32>} : memref<1x256xf32, #tpu.memory_space<vmem>>, vector<1x256xf32>,
      %cst_29 = arith.constant 0.000000e+00 : f32
      %38 = vector.broadcast %cst_29 : f32 to vector<1x256xf32>
      %c0_30 = arith.constant 0 : index
      %c0_31 = arith.constant 0 : index
      %39 = vector.load %arg11[%c0_30, %c0_31] : memref<1x256xf32, #tpu.memory_space<vmem>>, vector<1x256xf32>
      tpu.vector_store %arg11[%c0_30, %c0_31], %38 {strides = array<i32>} : memref<1x256xf32, #tpu.memory_space<vmem>>, vector<1x256xf32>,
      %cst_32 = arith.constant 0.000000e+00 : f32
      %40 = vector.broadcast %cst_32 : f32 to vector<32x256xf32>
      %c0_33 = arith.constant 0 : index
      %c0_34 = arith.constant 0 : index
      %41 = vector.load %arg12[%c0_33, %c0_34] : memref<32x256xf32, #tpu.memory_space<vmem>>, vector<32x256xf32>
      tpu.vector_store %arg12[%c0_33, %c0_34], %40 {strides = array<i32>} : memref<32x256xf32, #tpu.memory_space<vmem>>, vector<32x256xf32>,
    } else {
    }
    %c0 = arith.constant 0 : index
    %c0_1 = arith.constant 0 : index
    %c0_2 = arith.constant 0 : index
    %3 = vector.load %arg3[%c0, %c0_1, %c0_2] : memref<1x4x256xbf16, #tpu.memory_space<vmem>>, vector<1x4x256xbf16>
    %4 = vector.shape_cast %3 : vector<1x4x256xbf16> to vector<4x256xbf16>
    %c0_3 = arith.constant 0 : index
    %c0_4 = arith.constant 0 : index
    %c0_5 = arith.constant 0 : index
    %5 = vector.load %arg4[%c0_3, %c0_4, %c0_5] : memref<1x4x256xbf16, #tpu.memory_space<vmem>>, vector<1x4x256xbf16>
    %6 = vector.shape_cast %5 : vector<1x4x256xbf16> to vector<4x256xbf16>
    %c0_6 = arith.constant 0 : index
    %c0_7 = arith.constant 0 : index
    %c0_8 = arith.constant 0 : index
    %7 = vector.load %arg5[%c0_6, %c0_7, %c0_8] : memref<1x32x256xbf16, #tpu.memory_space<vmem>>, vector<1x32x256xbf16>
    %8 = vector.shape_cast %7 : vector<1x32x256xbf16> to vector<32x256xbf16>
    %cst = arith.constant dense<0.000000e+00> : vector<256x256xf32>
    %9 = tpu.matmul %6, %4, %cst {dimension_numbers = #tpu.dot_dimension_numbers<[0], [0], [1], [1], [0, 1, 1, 1], [], []>} : vector<4x256xbf16>, vector<4x256xbf16>, vector<256x256xf32> -> vector<256x256xf32>
    %c0_9 = arith.constant 0 : index
    %c0_10 = arith.constant 0 : index
    %10 = vector.load %arg10[%c0_9, %c0_10] : memref<1x256xf32, #tpu.memory_space<vmem>>, vector<1x256xf32>
    %cst_11 = arith.constant dense<0xFF800000> : vector<256xf32>
    %11 = vector.multi_reduction <maximumf>, %9, %cst_11 [0] : vector<256x256xf32> to vector<256xf32>
    %12 = vector.shape_cast %11 : vector<256xf32> to vector<1x256xf32>
    %13 = arith.maximumf %10, %12 : vector<1x256xf32>
    %14 = arith.subf %10, %13 : vector<1x256xf32>
    %15 = math.exp %14 : vector<1x256xf32>
    %16 = vector.broadcast %13 : vector<1x256xf32> to vector<256x256xf32>
    %17 = arith.subf %9, %16 : vector<256x256xf32>
    %18 = math.exp %17 : vector<256x256xf32>
    %c0_12 = arith.constant 0 : index
    %c0_13 = arith.constant 0 : index
    %19 = vector.load %arg11[%c0_12, %c0_13] : memref<1x256xf32, #tpu.memory_space<vmem>>, vector<1x256xf32>
    %20 = arith.mulf %15, %19 : vector<1x256xf32>
    %cst_14 = arith.constant dense<0.000000e+00> : vector<256xf32>
    %21 = vector.multi_reduction <add>, %18, %cst_14 [0] : vector<256x256xf32> to vector<256xf32>
    %22 = vector.shape_cast %21 : vector<256xf32> to vector<1x256xf32>
    %23 = arith.addf %20, %22 : vector<1x256xf32>
    %c0_15 = arith.constant 0 : index
    %c0_16 = arith.constant 0 : index
    %24 = vector.load %arg11[%c0_15, %c0_16] : memref<1x256xf32, #tpu.memory_space<vmem>>, vector<1x256xf32>
    tpu.vector_store %arg11[%c0_15, %c0_16], %23 {strides = array<i32>} : memref<1x256xf32, #tpu.memory_space<vmem>>, vector<1x256xf32>,
    %c0_17 = arith.constant 0 : index
    %c0_18 = arith.constant 0 : index
    %25 = vector.load %arg12[%c0_17, %c0_18] : memref<32x256xf32, #tpu.memory_space<vmem>>, vector<32x256xf32>
    %26 = vector.broadcast %15 : vector<1x256xf32> to vector<32x256xf32>
    %27 = arith.mulf %26, %25 : vector<32x256xf32>
    %28 = arith.truncf %18 : vector<256x256xf32> to vector<256x256xbf16>
    %cst_19 = arith.constant dense<0.000000e+00> : vector<32x256xf32>
    %29 = tpu.matmul %8, %28, %cst_19 {dimension_numbers = #tpu.dot_dimension_numbers<[1], [0], [0], [1], [0, 0, 1, 1], [], []>} : vector<32x256xbf16>, vector<256x256xbf16>, vector<32x256xf32> -> vector<32x256xf32>
    %30 = arith.addf %27, %29 : vector<32x256xf32>
    %c0_20 = arith.constant 0 : index
    %c0_21 = arith.constant 0 : index
    %31 = vector.load %arg12[%c0_20, %c0_21] : memref<32x256xf32, #tpu.memory_space<vmem>>, vector<32x256xf32>
    tpu.vector_store %arg12[%c0_20, %c0_21], %30 {strides = array<i32>} : memref<32x256xf32, #tpu.memory_space<vmem>>, vector<32x256xf32>,
    %c0_22 = arith.constant 0 : index
    %c0_23 = arith.constant 0 : index
    %32 = vector.load %arg10[%c0_22, %c0_23] : memref<1x256xf32, #tpu.memory_space<vmem>>, vector<1x256xf32>
    tpu.vector_store %arg10[%c0_22, %c0_23], %13 {strides = array<i32>} : memref<1x256xf32, #tpu.memory_space<vmem>>, vector<1x256xf32>,
    %c0_i32_24 = arith.constant 0 : i32
    %33 = arith.cmpi eq, %arg2, %c0_i32_24 : i32
    %34 = arith.extui %33 : i1 to i32
    %c0_i32_25 = arith.constant 0 : i32
    %35 = arith.cmpi ne, %34, %c0_i32_25 : i32
    scf.if %35 {
      %c0_26 = arith.constant 0 : index
      %c0_27 = arith.constant 0 : index
      %36 = vector.load %arg11[%c0_26, %c0_27] : memref<1x256xf32, #tpu.memory_space<vmem>>, vector<1x256xf32>
      %cst_28 = arith.constant 1.000000e+00 : f32
      %37 = vector.broadcast %cst_28 : f32 to vector<1x256xf32>
      %38 = arith.divf %37, %36 : vector<1x256xf32>
      %c0_29 = arith.constant 0 : index
      %c0_30 = arith.constant 0 : index
      %39 = vector.load %arg12[%c0_29, %c0_30] : memref<32x256xf32, #tpu.memory_space<vmem>>, vector<32x256xf32>
      %40 = vector.broadcast %38 : vector<1x256xf32> to vector<32x256xf32>
      %41 = arith.mulf %39, %40 : vector<32x256xf32>
      %c0_31 = arith.constant 0 : index
      %42 = memref.load %arg8[%c0_31] : memref<1xf32, #tpu.memory_space<smem>>
      %c0_32 = arith.constant 0 : index
      %c0_33 = arith.constant 0 : index
      %c0_34 = arith.constant 0 : index
      %43 = vector.load %arg7[%c0_32, %c0_33, %c0_34] : memref<1x32x1xf32, #tpu.memory_space<vmem>>, vector<1x32x1xf32>
      %44 = vector.shape_cast %43 : vector<1x32x1xf32> to vector<32x1xf32>
      %45 = vector.broadcast %44 : vector<32x1xf32> to vector<32x256xf32>
      %46 = arith.mulf %41, %45 : vector<32x256xf32>
      %47 = vector.broadcast %42 : f32 to vector<32x256xf32>
      %48 = arith.mulf %47, %46 : vector<32x256xf32>
      %c0_35 = arith.constant 0 : index
      %c0_36 = arith.constant 0 : index
      %c0_37 = arith.constant 0 : index
      %49 = vector.load %arg6[%c0_35, %c0_36, %c0_37] : memref<1x32x256xf32, #tpu.memory_space<vmem>>, vector<1x32x256xf32>
      %50 = vector.shape_cast %49 : vector<1x32x256xf32> to vector<32x256xf32>
      %51 = arith.addf %48, %50 : vector<32x256xf32>
      %c0_38 = arith.constant 0 : index
      %c0_39 = arith.constant 0 : index
      %c0_40 = arith.constant 0 : index
      %52 = vector.load %arg9[%c0_38, %c0_39, %c0_40] : memref<1x32x256xf32, #tpu.memory_space<vmem>>, vector<1x32x256xf32>
      %53 = vector.shape_cast %52 : vector<1x32x256xf32> to vector<32x256xf32>
      %54 = vector.shape_cast %51 : vector<32x256xf32> to vector<1x32x256xf32>
      tpu.vector_store %arg9[%c0_38, %c0_39, %c0_40], %54 {strides = array<i32>} : memref<1x32x256xf32, #tpu.memory_space<vmem>>, vector<1x32x256xf32>,
    } else {
    }
    return
  }
  func.func @transform_0(%arg0: i32, %arg1: i32, %arg2: i32) -> (i32, i32, i32) {
    %c0_i32 = arith.constant 0 : i32
    %c0_i32_0 = arith.constant 0 : i32
    return %arg0, %c0_i32, %arg1 : i32, i32, i32
  }
  func.func @transform_1(%arg0: i32, %arg1: i32, %arg2: i32) -> (i32, i32, i32) {
    %c0_i32 = arith.constant 0 : i32
    %c0_i32_0 = arith.constant 0 : i32
    return %arg0, %c0_i32, %arg2 : i32, i32, i32
  }
  func.func @transform_2(%arg0: i32, %arg1: i32, %arg2: i32) -> (i32, i32, i32) {
    %c0_i32 = arith.constant 0 : i32
    %c0_i32_0 = arith.constant 0 : i32
    return %arg0, %c0_i32, %arg2 : i32, i32, i32
  }
  func.func @transform_3(%arg0: i32, %arg1: i32, %arg2: i32) -> (i32, i32, i32) {
    %c0_i32 = arith.constant 0 : i32
    %c0_i32_0 = arith.constant 0 : i32
    return %arg0, %c0_i32, %arg1 : i32, i32, i32
  }
  func.func @transform_4(%arg0: i32, %arg1: i32, %arg2: i32) -> (i32, i32, i32) {
    %c0_i32 = arith.constant 0 : i32
    %c0_i32_0 = arith.constant 0 : i32
    %c0_i32_1 = arith.constant 0 : i32
    return %arg0, %c0_i32, %c0_i32_0 : i32, i32, i32
  }
  func.func @transform_5(%arg0: i32, %arg1: i32, %arg2: i32) -> i32 {
    %c0_i32 = arith.constant 0 : i32
    %c0_i32_0 = arith.constant 0 : i32
    return %c0_i32 : i32
  }
  func.func @transform_6(%arg0: i32, %arg1: i32, %arg2: i32) -> (i32, i32, i32) {
    %c0_i32 = arith.constant 0 : i32
    %c0_i32_0 = arith.constant 0 : i32
    return %arg0, %c0_i32, %arg1 : i32, i32, i32
  }
}

</mosaic_0001>

<llo_original>
// kernel: tpu_custom_call.1
$region0: #{tpu_custom_call.1}
  #allocation0 [shape = 'u32[]', space=smem, size = 0x4, offset = 0x4, fixed_abs, tag = 'smem constant byte address 0x4 - core index']
  #allocation1 [shape = 'u32[72,128]{1,0:T(1,128)}', space=vmem, size = 0x9000, scoped, tag = 'internal scratch']
  #allocation2 [shape = 'f32[1,256]{1,0:T(1,128)}', space=vmem, size = 0x400, scoped, tag = 'scratch operand']
  #allocation3 [shape = 'f32[1,256]{1,0:T(1,128)}', space=vmem, size = 0x400, scoped, tag = 'scratch operand']
  #allocation4 [shape = 'f32[32,256]{1,0:T(8,128)}', space=vmem, size = 0x8000, scoped, tag = 'scratch operand']
  #allocation5 [shape = 'f32[1]{0:T(128)S(6)}', space=smem, size = 0x200, scoped, tag = 'scoped memory for tpu_custom_call.1']
  %s0 = inlined_call_operand.hbm [shape: bf16[2,4,256], index: 0, kind: input, shape index: {}]
  %s1 = inlined_call_operand.hbm [shape: bf16[2,4,256], index: 1, kind: input, shape index: {}]
  %s2 = inlined_call_operand.vmem [shape: bf16[2,32,256], index: 2, kind: input, shape index: {}]
  %s3 = inlined_call_operand.hbm [shape: f32[2,32,256], index: 3, kind: input, shape index: {}]
  %s4 = inlined_call_operand.vmem [shape: f32[2,32,1], index: 4, kind: input, shape index: {}]
  %s5 = inlined_call_operand.<no memory space> [shape: f32[1], index: 5, kind: input, shape index: {}]
  %s6 = inlined_call_operand.hbm [shape: f32[2,32,256], index: 6, kind: output, shape index: {}]
  %s7 = sld [smem:[#allocation0]]
  $region77: #{tpu_custom_call.1} parent=0
    _
  %s9 = ssub.s32 1, %s7
  %s10 = scalar_select 0, %s9, %s7
  %11 = sst [smem:[#allocation5]] %s5
  $region1: #{tpu_custom_call.1} parent=0
    #allocation6 [shape = 'u8[4096]{0}', space=vmem, size = 0x1000, scoped, tag = 'input window, operand 0']
    #allocation7 [shape = 's32[2]{0}', space=sflag, size = 0x8, scoped, tag = 'scoped memory for tpu_custom_call.1']
    #allocation8 [shape = 's32[2]{0}', space=sflag, size = 0x8, scoped, tag = 'scoped memory for tpu_custom_call.1']
    #allocation9 [shape = 'u8[4096]{0}', space=vmem, size = 0x1000, scoped, tag = 'input window, operand 1']
    #allocation10 [shape = 's32[2]{0}', space=sflag, size = 0x8, scoped, tag = 'scoped memory for tpu_custom_call.1']
    #allocation11 [shape = 'u8[65536]{0}', space=vmem, size = 0x10000, scoped, tag = 'input window, operand 3']
    #allocation12 [shape = 'u8[65536]{0}', space=vmem, size = 0x10000, scoped, tag = 'output window, operand 0']
    %12 = vsyncpa [#allocation7], 0
    %s13 = scalar_lea.sflag [#allocation7], 1
    %14 = vsyncpa %s13, 0
    %15 = vsyncpa [#allocation10], 0
    %s16 = scalar_lea.sflag [#allocation10], 1
    %17 = vsyncpa %s16, 0
    %18 = vsyncpa [#allocation8], 0
    %s19 = scalar_lea.sflag [#allocation8], 1
    %20 = vsyncpa %s19, 0
    loop: start=0, step=1, limit=4
    $region2: #{tpu_custom_call.1} parent=1 // loop_pre_header
      _
    $region3: #{tpu_custom_call.1} parent=1 // loop_header
      %s22 = sphi 0, %s26
      %p23 = scmp.ge.s32.totalorder %s22, 4
      %s29 = sphi 0, %s48
      %s30 = sphi 0, %s44
      %s31 = sphi 0, %s40
      %s32 = sphi 0, %s29
      %s33 = sphi 0, %s30
      %s34 = sphi 0, %s31
      %s35 = sphi 0, %s32
      %s36 = sphi 0, %s33
      %s37 = sphi 0, %s34
      %s53 = sphi 0, %s55
      %s56 = sphi 0, %s53
      %s57 = sphi 0, %s56
      %s73 = sphi 0, %s57
      %s81 = sphi 0, %s83
      %s84 = sphi 0, %s81
      %s85 = sphi 0, %s84
      %s101 = sphi 0, %s85
      %s109 = sphi 0, %s111
      %s112 = sphi 0, %s109
      %s113 = sphi 0, %s112
      %s129 = sphi 0, %s113
      %s137 = sphi 0, %s139
      %s140 = sphi 0, %s137
      %s141 = sphi 0, %s140
      %s157 = sphi 0, %s141
      %s163 = sphi 0, %s165
      %s166 = sphi 0, %s163
      %s167 = sphi 0, %s166
      %s183 = sphi 0, %s167
      %s187 = sphi 0, %s187
      %s189 = sphi 0, %s187
      %s190 = sphi 0, %s189
      %s204 = sphi 0, %s190
      %s212 = sphi 0, %s214
      %s215 = sphi 0, %s212
      %s216 = sphi 0, %s215
      %s232 = sphi 0, %s216
    $region4: #{tpu_custom_call.1} parent=1 // loop_header_branch
      %25 = sbr.rel (%p23) target = $region8
    $region5: #{tpu_custom_call.1} parent=1 // loop_body
      %s27 = ssub.s32 %s22, 1
      %s28 = ssub.s32 %s22, 2
      %s38 = sadd.s32 1, %s31
      %p39 = scmp.ge.s32.totalorder %s38, 1
      %s40 = scalar_select %p39, 0, %s38
      %s41 = sadd.s32 1, %s30
      %s42 = scalar_select %p39, %s41, %s30
      %p43 = scmp.ge.s32.totalorder %s42, 1
      %s44 = scalar_select %p43, 0, %s42
      %s45 = sadd.s32 1, %s29
      %s46 = scalar_select %p43, %s45, %s29
      %p47 = scmp.ge.s32.totalorder %s46, 2
      %s48 = scalar_select %p47, 0, %s46
      %s49 = ssub.s32 %s29, %s48
      %s50 = ssub.s32 %s30, %s44
      %s51 = sor.u32 %s49, %s50
      %p52 = scmp.eq.s32.totalorder %s51, 0
      %s54 = sadd.s32 %s53, 1
      %s55 = scalar_select %p52, %s53, %s54
      %p58 = pneg %p52
      %p59 = scmp.eq.s32.totalorder %s22, 1
      %p60 = por %p58, %p59
      %p61 = scmp.ne.s32.totalorder %s53, %s56
      %p62 = scmp.eq.s32.totalorder %s22, 0
      %p63 = por %p61, %p62
      %p64 = scmp.ne.s32.totalorder %s53, %s56
      %p65 = scmp.eq.s32.totalorder %s27, 1
      %p66 = por %p64, %p65
      %p67 = scmp.ne.s32.totalorder %s56, %s57
      %p68 = scmp.eq.s32.totalorder %s27, 0
      %p69 = por %p67, %p68
      %p70 = scmp.ne.s32.totalorder %s56, %s57
      %p71 = scmp.eq.s32.totalorder %s28, 1
      %p72 = por %p70, %p71
      %p74 = scmp.ne.s32.totalorder %s57, %s73
      %p75 = scmp.eq.s32.totalorder %s28, 0
      %p76 = por %p74, %p75
      %s77 = ssub.s32 %s29, %s48
      %s78 = ssub.s32 %s31, %s40
      %s79 = sor.u32 %s77, %s78
      %p80 = scmp.eq.s32.totalorder %s79, 0
      %s82 = sadd.s32 %s81, 1
      %s83 = scalar_select %p80, %s81, %s82
      %p86 = pneg %p80
      %p87 = scmp.eq.s32.totalorder %s22, 1
      %p88 = por %p86, %p87
      %p89 = scmp.ne.s32.totalorder %s81, %s84
      %p90 = scmp.eq.s32.totalorder %s22, 0
      %p91 = por %p89, %p90
      %p92 = scmp.ne.s32.totalorder %s81, %s84
      %p93 = scmp.eq.s32.totalorder %s27, 1
      %p94 = por %p92, %p93
      %p95 = scmp.ne.s32.totalorder %s84, %s85
      %p96 = scmp.eq.s32.totalorder %s27, 0
      %p97 = por %p95, %p96
      %p98 = scmp.ne.s32.totalorder %s84, %s85
      %p99 = scmp.eq.s32.totalorder %s28, 1
      %p100 = por %p98, %p99
      %p102 = scmp.ne.s32.totalorder %s85, %s101
      %p103 = scmp.eq.s32.totalorder %s28, 0
      %p104 = por %p102, %p103
      %s105 = ssub.s32 %s29, %s48
      %s106 = ssub.s32 %s31, %s40
      %s107 = sor.u32 %s105, %s106
      %p108 = scmp.eq.s32.totalorder %s107, 0
      %s110 = sadd.s32 %s109, 1
      %s111 = scalar_select %p108, %s109, %s110
      %p114 = pneg %p108
      %p115 = scmp.eq.s32.totalorder %s22, 1
      %p116 = por %p114, %p115
      %p117 = scmp.ne.s32.totalorder %s109, %s112
      %p118 = scmp.eq.s32.totalorder %s22, 0
      %p119 = por %p117, %p118
      %p120 = scmp.ne.s32.totalorder %s109, %s112
      %p121 = scmp.eq.s32.totalorder %s27, 1
      %p122 = por %p120, %p121
      %p123 = scmp.ne.s32.totalorder %s112, %s113
      %p124 = scmp.eq.s32.totalorder %s27, 0
      %p125 = por %p123, %p124
      %p126 = scmp.ne.s32.totalorder %s112, %s113
      %p127 = scmp.eq.s32.totalorder %s28, 1
      %p128 = por %p126, %p127
      %p130 = scmp.ne.s32.totalorder %s113, %s129
      %p131 = scmp.eq.s32.totalorder %s28, 0
      %p132 = por %p130, %p131
      %s133 = ssub.s32 %s29, %s48
      %s134 = ssub.s32 %s30, %s44
      %s135 = sor.u32 %s133, %s134
      %p136 = scmp.eq.s32.totalorder %s135, 0
      %s138 = sadd.s32 %s137, 1
      %s139 = scalar_select %p136, %s137, %s138
      %p142 = pneg %p136
      %p143 = scmp.eq.s32.totalorder %s22, 1
      %p144 = por %p142, %p143
      %p145 = scmp.ne.s32.totalorder %s137, %s140
      %p146 = scmp.eq.s32.totalorder %s22, 0
      %p147 = por %p145, %p146
      %p148 = scmp.ne.s32.totalorder %s137, %s140
      %p149 = scmp.eq.s32.totalorder %s27, 1
      %p150 = por %p148, %p149
      %p151 = scmp.ne.s32.totalorder %s140, %s141
      %p152 = scmp.eq.s32.totalorder %s27, 0
      %p153 = por %p151, %p152
      %p154 = scmp.ne.s32.totalorder %s140, %s141
      %p155 = scmp.eq.s32.totalorder %s28, 1
      %p156 = por %p154, %p155
      %p158 = scmp.ne.s32.totalorder %s141, %s157
      %p159 = scmp.eq.s32.totalorder %s28, 0
      %p160 = por %p158, %p159
      %s161 = ssub.s32 %s29, %s48
      %p162 = scmp.eq.s32.totalorder %s161, 0
      %s164 = sadd.s32 %s163, 1
      %s165 = scalar_select %p162, %s163, %s164
      %p168 = pneg %p162
      %p169 = scmp.eq.s32.totalorder %s22, 1
      %p170 = por %p168, %p169
      %p171 = scmp.ne.s32.totalorder %s163, %s166
      %p172 = scmp.eq.s32.totalorder %s22, 0
      %p173 = por %p171, %p172
      %p174 = scmp.ne.s32.totalorder %s163, %s166
      %p175 = scmp.eq.s32.totalorder %s27, 1
      %p176 = por %p174, %p175
      %p177 = scmp.ne.s32.totalorder %s166, %s167
      %p178 = scmp.eq.s32.totalorder %s27, 0
      %p179 = por %p177, %p178
      %p180 = scmp.ne.s32.totalorder %s166, %s167
      %p181 = scmp.eq.s32.totalorder %s28, 1
      %p182 = por %p180, %p181
      %p184 = scmp.ne.s32.totalorder %s167, %s183
      %p185 = scmp.eq.s32.totalorder %s28, 0
      %p186 = por %p184, %p185
      %s188 = sadd.s32 %s187, 1
      %p191 = scmp.eq.s32.totalorder %s22, 1
      %p192 = scmp.ne.s32.totalorder %s187, %s189
      %p193 = scmp.eq.s32.totalorder %s22, 0
      %p194 = por %p192, %p193
      %p195 = scmp.ne.s32.totalorder %s187, %s189
      %p196 = scmp.eq.s32.totalorder %s27, 1
      %p197 = por %p195, %p196
      %p198 = scmp.ne.s32.totalorder %s189, %s190
      %p199 = scmp.eq.s32.totalorder %s27, 0
      %p200 = por %p198, %p199
      %p201 = scmp.ne.s32.totalorder %s189, %s190
      %p202 = scmp.eq.s32.totalorder %s28, 1
      %p203 = por %p201, %p202
      %p205 = scmp.ne.s32.totalorder %s190, %s204
      %p206 = scmp.eq.s32.totalorder %s28, 0
      %p207 = por %p205, %p206
      %s208 = ssub.s32 %s29, %s48
      %s209 = ssub.s32 %s30, %s44
      %s210 = sor.u32 %s208, %s209
      %p211 = scmp.eq.s32.totalorder %s210, 0
      %s213 = sadd.s32 %s212, 1
      %s214 = scalar_select %p211, %s212, %s213
      %p217 = pneg %p211
      %p218 = scmp.eq.s32.totalorder %s22, 1
      %p219 = por %p217, %p218
      %p220 = scmp.ne.s32.totalorder %s212, %s215
      %p221 = scmp.eq.s32.totalorder %s22, 0
      %p222 = por %p220, %p221
      %p223 = scmp.ne.s32.totalorder %s212, %s215
      %p224 = scmp.eq.s32.totalorder %s27, 1
      %p225 = por %p223, %p224
      %p226 = scmp.ne.s32.totalorder %s215, %s216
      %p227 = scmp.eq.s32.totalorder %s27, 0
      %p228 = por %p226, %p227
      %p229 = scmp.ne.s32.totalorder %s215, %s216
      %p230 = scmp.eq.s32.totalorder %s28, 1
      %p231 = por %p229, %p230
      %p233 = scmp.ne.s32.totalorder %s216, %s232
      %p234 = scmp.eq.s32.totalorder %s28, 0
      %p235 = por %p233, %p234
      %p236 = scmp.le.s32.totalorder 1, %s22
      %p237 = scmp.lt.s32.totalorder %s22, 3
      %p238 = pnand %p236, %p237
      %p239 = pneg %p238
      // Predicated region
      $region9: #{tpu_custom_call.1} parent=5 // pred_check
        _
      $region10: #{tpu_custom_call.1} parent=5 // pred_check_branch
        %241 = sbr.rel (%p238) target = $region12
      $region11: #{tpu_custom_call.1} parent=5 // pred_region
        %s242 = ssub.s32 %s22, 1
        // Predicated region
        $region13: #{tpu_custom_call.1} parent=11 // pred_check
          %p243 = pneg %p200
        $region14: #{tpu_custom_call.1} parent=11 // pred_check_branch
          %245 = sbr.rel (%p243) target = $region16
        $region15: #{tpu_custom_call.1} parent=11 // pred_region
          _
        $region16: #{tpu_custom_call.1} parent=11 // pred_fallthru
          _
      $region12: #{tpu_custom_call.1} parent=5 // pred_fallthru
        _
      %p246 = scmp.lt.s32.totalorder %s22, 2
      // Predicated region
      $region17: #{tpu_custom_call.1} parent=5 // pred_check
        %p247 = pneg %p246
      $region18: #{tpu_custom_call.1} parent=5 // pred_check_branch
        %249 = sbr.rel (%p247) target = $region20
      $region19: #{tpu_custom_call.1} parent=5 // pred_region
        // Predicated region
        $region21: #{tpu_custom_call.1} parent=19 // pred_check
          %p250 = pneg %p63
        $region22: #{tpu_custom_call.1} parent=19 // pred_check_branch
          %252 = sbr.rel (%p250) target = $region24
        $region23: #{tpu_custom_call.1} parent=19 // pred_region
          %s253 = sand.u32 %s53, 1
          %s254 = scalar_lea.sflag [#allocation7], %s253
          %s255 = sand.u32 %s53, 1
          %s256 = smul.addr %s255, 4
          %s257 = scalar_lea.vmem [#allocation6], %s256
          %s258 = smul.u32 2, %s30
          %260 = vsyncadd %s254, 0
          %s261 = smul.addr %s29, 2
          %s262 = sadd.s32 %s258, %s261
          %s263 = smul.addr %s262, 2
          %s264 = scalar_lea.hbm %s0, %s263
          %s266 = sshll.u32 %s264, 4
          %s267 = int_to_ptr.hbm [resolvable:$true] %s266
          %s268 = sshll.u32 %s257, 4
          %s269 = int_to_ptr.vmem [resolvable:$true] %s268
          %271 = dma.hbm_to_vmem [thread:$0]  %s267, 64, %s269, %s254
        $region24: #{tpu_custom_call.1} parent=19 // pred_fallthru
          _
        // Predicated region
        $region25: #{tpu_custom_call.1} parent=19 // pred_check
          %p272 = pneg %p91
        $region26: #{tpu_custom_call.1} parent=19 // pred_check_branch
          %274 = sbr.rel (%p272) target = $region28
        $region27: #{tpu_custom_call.1} parent=19 // pred_region
          %s275 = sand.u32 %s22, 1
          %s276 = scalar_lea.sflag [#allocation10], %s275
          %s277 = sand.u32 %s81, 1
          %s278 = smul.addr %s277, 4
          %s279 = scalar_lea.vmem [#allocation9], %s278
          %s280 = smul.u32 2, %s31
          %282 = vsyncadd %s276, 0
          %s283 = smul.addr %s29, 2
          %s284 = sadd.s32 %s280, %s283
          %s285 = smul.addr %s284, 2
          %s286 = scalar_lea.hbm %s1, %s285
          %s288 = sshll.u32 %s286, 4
          %s289 = int_to_ptr.hbm [resolvable:$true] %s288
          %s290 = sshll.u32 %s279, 4
          %s291 = int_to_ptr.vmem [resolvable:$true] %s290
          %293 = dma.hbm_to_vmem [thread:$0]  %s289, 64, %s291, %s276
        $region28: #{tpu_custom_call.1} parent=19 // pred_fallthru
          _
        // Predicated region
        $region29: #{tpu_custom_call.1} parent=19 // pred_check
          %p294 = pneg %p119
        $region30: #{tpu_custom_call.1} parent=19 // pred_check_branch
          %296 = sbr.rel (%p294) target = $region32
        $region31: #{tpu_custom_call.1} parent=19 // pred_region
          %s297 = smul.u32 2, %s31
          %p298 = scmp.lt.s32.totalorder %s29, 1
          %s299 = scalar_select %p298, %s29, 1
          %p300 = scmp.lt.s32.totalorder %s297, 1
          %s301 = scalar_select %p300, %s297, 1
          %s302 = smul.addr %s299, 8
          %s303 = sadd.s32 %s301, %s302
          %s304 = smul.addr %s303, 4
          %s305 = scalar_lea.vmem %s2, %s304
          %s306 = smul.u32 2, %s31
        $region32: #{tpu_custom_call.1} parent=19 // pred_fallthru
          _
        // Predicated region
        $region33: #{tpu_custom_call.1} parent=19 // pred_check
          %p307 = pneg %p147
        $region34: #{tpu_custom_call.1} parent=19 // pred_check_branch
          %309 = sbr.rel (%p307) target = $region36
        $region35: #{tpu_custom_call.1} parent=19 // pred_region
          %s310 = sand.u32 %s22, 1
          %s311 = scalar_lea.sflag [#allocation10], %s310
          %s312 = sand.u32 %s137, 1
          %s313 = smul.addr %s312, 64
          %s314 = scalar_lea.vmem [#allocation11], %s313
          %s315 = smul.u32 2, %s30
          %317 = vsyncadd %s311, 0
          %s318 = smul.addr %s29, 8
          %s319 = sadd.s32 %s315, %s318
          %s320 = smul.addr %s319, 8
          %s321 = scalar_lea.hbm %s3, %s320
          %s322 = sshll.u32 %s321, 4
          %s323 = int_to_ptr.hbm [resolvable:$true] %s322
          %s324 = sshll.u32 %s314, 4
          %s325 = int_to_ptr.vmem [resolvable:$true] %s324
          %330 = dma.hbm_to_vmem [thread:$0]  %s323, 1024, %s325, %s311, 256, 256, 16
        $region36: #{tpu_custom_call.1} parent=19 // pred_fallthru
          _
        // Predicated region
        $region37: #{tpu_custom_call.1} parent=19 // pred_check
          %p331 = pneg %p173
        $region38: #{tpu_custom_call.1} parent=19 // pred_check_branch
          %333 = sbr.rel (%p331) target = $region40
        $region39: #{tpu_custom_call.1} parent=19 // pred_region
          %p334 = scmp.lt.s32.totalorder %s29, 1
          %s335 = scalar_select %p334, %s29, 1
          %s336 = smul.addr %s335, 4
          %s337 = smul.addr %s336, 8
          %s338 = scalar_lea.vmem %s4, %s337
        $region40: #{tpu_custom_call.1} parent=19 // pred_fallthru
          _
      $region20: #{tpu_custom_call.1} parent=5 // pred_fallthru
        _
      %p339 = scmp.le.s32.totalorder 1, %s22
      %p340 = scmp.lt.s32.totalorder %s22, 3
      %p341 = pnand %p339, %p340
      %p342 = pneg %p341
      // Predicated region
      $region41: #{tpu_custom_call.1} parent=5 // pred_check
        _
      $region42: #{tpu_custom_call.1} parent=5 // pred_check_branch
        %344 = sbr.rel (%p341) target = $region44
      $region43: #{tpu_custom_call.1} parent=5 // pred_region
        %s345 = ssub.s32 %s22, 1
        %s346 = sand.u32 %s56, 1
        %s347 = scalar_lea.sflag [#allocation7], %s346
        %s348 = sand.u32 %s56, 1
        %s349 = smul.addr %s348, 4
        %s350 = scalar_lea.vmem [#allocation6], %s349
        // Predicated region
        $region45: #{tpu_custom_call.1} parent=43 // pred_check
          %p351 = pneg %p69
        $region46: #{tpu_custom_call.1} parent=43 // pred_check_branch
          %353 = sbr.rel (%p351) target = $region48
        $region47: #{tpu_custom_call.1} parent=43 // pred_region
          %355 = dma.done %s347, 64
        $region48: #{tpu_custom_call.1} parent=43 // pred_fallthru
          _
        %s356 = sand.u32 %s27, 1
        %s357 = scalar_lea.sflag [#allocation10], %s356
        %s358 = sand.u32 %s84, 1
        %s359 = smul.addr %s358, 4
        %s360 = scalar_lea.vmem [#allocation9], %s359
        // Predicated region
        $region49: #{tpu_custom_call.1} parent=43 // pred_check
          %p361 = pneg %p97
        $region50: #{tpu_custom_call.1} parent=43 // pred_check_branch
          %363 = sbr.rel (%p361) target = $region52
        $region51: #{tpu_custom_call.1} parent=43 // pred_region
          %365 = dma.done %s357, 64
        $region52: #{tpu_custom_call.1} parent=43 // pred_fallthru
          _
        %s366 = sand.u32 %s27, 1
        %s367 = scalar_lea.sflag [#allocation10], %s366
        %s368 = sand.u32 %s140, 1
        %s369 = smul.addr %s368, 64
        %s370 = scalar_lea.vmem [#allocation11], %s369
        // Predicated region
        $region53: #{tpu_custom_call.1} parent=43 // pred_check
          %p371 = pneg %p153
        $region54: #{tpu_custom_call.1} parent=43 // pred_check_branch
          %373 = sbr.rel (%p371) target = $region56
        $region55: #{tpu_custom_call.1} parent=43 // pred_region
          %375 = dma.done %s367, 1024
        $region56: #{tpu_custom_call.1} parent=43 // pred_fallthru
          _
        %s376 = sand.u32 %s56, 1
        %s377 = scalar_lea.sflag [#allocation7], %s376
        %s378 = sand.u32 %s56, 1
        %s379 = smul.addr %s378, 4
        %s380 = scalar_lea.vmem [#allocation6], %s379
        %p381 = pneg %p69
        %p382 = pneg %p66
        %s383 = sand.u32 %s27, 1
        %s384 = scalar_lea.sflag [#allocation10], %s383
        %s385 = sand.u32 %s84, 1
        %s386 = smul.addr %s385, 4
        %s387 = scalar_lea.vmem [#allocation9], %s386
        %p388 = pneg %p97
        %p389 = pneg %p94
        %s390 = smul.u32 2, %s34
        %p391 = scmp.lt.s32.totalorder %s32, 1
        %s392 = scalar_select %p391, %s32, 1
        %p393 = scmp.lt.s32.totalorder %s390, 1
        %s394 = scalar_select %p393, %s390, 1
        %s395 = smul.addr %s392, 8
        %s396 = sadd.s32 %s394, %s395
        %s397 = smul.addr %s396, 4
        %s398 = scalar_lea.vmem %s2, %s397
        %p399 = pneg %p125
        %p400 = pneg %p122
        %s401 = sand.u32 %s27, 1
        %s402 = scalar_lea.sflag [#allocation10], %s401
        %s403 = sand.u32 %s140, 1
        %s404 = smul.addr %s403, 64
        %s405 = scalar_lea.vmem [#allocation11], %s404
        %p406 = pneg %p153
        %p407 = pneg %p150
        %p408 = scmp.lt.s32.totalorder %s32, 1
        %s409 = scalar_select %p408, %s32, 1
        %s410 = smul.addr %s409, 4
        %s411 = smul.addr %s410, 8
        %s412 = scalar_lea.vmem %s4, %s411
        %p413 = pneg %p179
        %p414 = pneg %p176
        %p415 = pneg %p200
        %p416 = pneg %p197
        %p417 = pneg %p228
        %p418 = pneg %p225
        %s419 = sand.u32 %s215, 1
        %s420 = scalar_lea.sflag [#allocation8], %s419
        %s421 = sand.u32 %s215, 1
        %s422 = smul.addr %s421, 64
        %s423 = scalar_lea.vmem [#allocation12], %s422
        %s424 = smul.u32 2, %s33
        %s425 = smul.u32 2, %s34
        %s426 = smul.u32 2, %s34
        %p427 = scmp.lt.s32.totalorder %s32, 1
        %s428 = scalar_select %p427, %s32, 1
        %p429 = scmp.lt.s32.totalorder %s426, 1
        %s430 = scalar_select %p429, %s426, 1
        %s431 = smul.addr %s428, 8
        %s432 = sadd.s32 %s430, %s431
        %s433 = smul.addr %s432, 4
        %s434 = scalar_lea.vmem %s2, %s433
        %s435 = smul.u32 2, %s34
        %s436 = smul.u32 2, %s33
        %p437 = scmp.lt.s32.totalorder %s32, 1
        %s438 = scalar_select %p437, %s32, 1
        %s439 = smul.addr %s438, 4
        %s440 = smul.addr %s439, 8
        %s441 = scalar_lea.vmem %s4, %s440
        %s442 = smul.u32 2, %s33
        %p444 = scmp.eq.s32.totalorder %s34, 0
        // Predicated region
        $region57: #{tpu_custom_call.1} parent=43 // pred_check
          %p445 = pneg %p444
        $region58: #{tpu_custom_call.1} parent=43 // pred_check_branch
          %447 = sbr.rel (%p445) target = $region60
        $region59: #{tpu_custom_call.1} parent=43 // pred_region
          %v448 = vlaneseq
          %vm449 = vcmp.ge.s32.totalorder %v448, 0
          %vm450 = vcmp.lt.s32.totalorder %v448, 256
          %vm451 = vmand %vm449, %vm450
          %452 = vst.msk [vmem:[#allocation2] sm:$0x3] %vm451, -inf
          %453 = vst.msk [vmem:[#allocation3] sm:$0x3] %vm451, 0.0
          %454 = vst [vmem:[#allocation4] sm:$0xff] 0.0
          %455 = vst [vmem:[#allocation4 + $0x8] sm:$0xff] 0.0
          %456 = vst [vmem:[#allocation4 + $0x10] sm:$0xff] 0.0
          %457 = vst [vmem:[#allocation4 + $0x18] sm:$0xff] 0.0
          %458 = vst [vmem:[#allocation4 + $0x20] sm:$0xff] 0.0
          %459 = vst [vmem:[#allocation4 + $0x28] sm:$0xff] 0.0
          %460 = vst [vmem:[#allocation4 + $0x30] sm:$0xff] 0.0
          %461 = vst [vmem:[#allocation4 + $0x38] sm:$0xff] 0.0
        $region60: #{tpu_custom_call.1} parent=43 // pred_fallthru
          _
        %v462 = vld [vmem:[%s350] sm:$0xf]
        %v463 = vld [vmem:[%s360] sm:$0xf]
        %v464 = vld [vmem:[%s434] sm:$0xff]
        %v465 = vld [vmem:[%s434 + $0x8] sm:$0xff]
        %v466 = vld [vmem:[%s434 + $0x10] sm:$0xff]
        %v467 = vld [vmem:[%s434 + $0x18] sm:$0xff]
        %469 = vst [vmem:[#allocation1] ss:$4 sm:$0xff] %v463
        %v470 = vld.sshfl [vmem:[#allocation1] sm:$0xff pattern:$0x73625140]
        %v471 = vld.sshfl [vmem:[#allocation1 + $0x8] sm:$0xff pattern:$0x73625140]
        %474 = vxpose.binary.xlu0.c.b16.start [1/16] %v471, %v470, 128
        %475 = vxpose.binary.xlu0.c.b16.cont [2/16] 0, 0, 128
        %476 = vxpose.binary.xlu0.c.b16.cont [3/16] 0, 0, 128
        %477 = vxpose.binary.xlu0.c.b16.cont [4/16] 0, 0, 128
        %478 = vxpose.binary.xlu0.c.b16.cont [5/16] 0, 0, 128
        %479 = vxpose.binary.xlu0.c.b16.cont [6/16] 0, 0, 128
        %480 = vxpose.binary.xlu0.c.b16.cont [7/16] 0, 0, 128
        %481 = vxpose.binary.xlu0.c.b16.end [8/16] 0, 0, 128
        %v482 = vpop.trf.xlu0
        %v483 = vpop.trf.xlu0
        %v484 = vpop.trf.xlu0
        %v485 = vpop.trf.xlu0
        %v486 = vpop.trf.xlu0
        %v487 = vpop.trf.xlu0
        %v488 = vpop.trf.xlu0
        %v489 = vpop.trf.xlu0
        %v490 = vpop.trf.xlu0
        %v491 = vpop.trf.xlu0
        %v492 = vpop.trf.xlu0
        %v493 = vpop.trf.xlu0
        %v494 = vpop.trf.xlu0
        %v495 = vpop.trf.xlu0
        %v496 = vpop.trf.xlu0
        %v497 = vpop.trf.xlu0
        %499 = vst [vmem:[#allocation1] ss:$4 sm:$0xff] %v462
        %v500 = vld.sshfl [vmem:[#allocation1] sm:$0xff pattern:$0x73625140]
        %v501 = vld.sshfl [vmem:[#allocation1 + $0x8] sm:$0xff pattern:$0x73625140]
        %vm502 = vcmask 31744
        %v504 = vsel %vm502, %v482, 0
        %v507 = vsel %vm502, %v484, 0
        %v510 = vsel %vm502, %v486, 0
        %v513 = vsel %vm502, %v488, 0
        %v516 = vsel %vm502, %v490, 0
        %v519 = vsel %vm502, %v492, 0
        %v522 = vsel %vm502, %v494, 0
        %v525 = vsel %vm502, %v496, 0
        %v528 = vsel %vm502, %v483, 0
        %v531 = vsel %vm502, %v485, 0
        %v534 = vsel %vm502, %v487, 0
        %v537 = vsel %vm502, %v489, 0
        %v540 = vsel %vm502, %v491, 0
        %v543 = vsel %vm502, %v493, 0
        %v546 = vsel %vm502, %v495, 0
        %v549 = vsel %vm502, %v497, 0
        %vm551 = vcmask 1041408
        %v552 = vsel %vm551, %v500, 0
        %v554 = vsel %vm551, %v501, 0
        %556 = vmatpush.bf16.msra.mxu0 0
        %557 = vmatpush.bf16.msra.mxu0 0
        %558 = vmatpush.bf16.msra.mxu0 0
        %559 = vmatpush.bf16.msra.mxu0 0
        %560 = vmatpush.bf16.msra.mxu0 0
        %561 = vmatpush.bf16.msra.mxu0 0
        %562 = vmatpush.bf16.msra.mxu0 0
        %563 = vmatpush.bf16.msra.mxu0 %v552
        %564 = vmatmul.bf16.gmra.mxu0 %v504
        %v565 = vpop.f32.mrf.mxu0
        %v566 = vadd.f32 0.0, %v565
        %v567 = vpop.f32.mrf.mxu0
        %v568 = vadd.f32 0.0, %v567
        %569 = vmatmul.bf16.gmra.mxu0 %v507
        %v570 = vpop.f32.mrf.mxu0
        %v571 = vadd.f32 0.0, %v570
        %v572 = vpop.f32.mrf.mxu0
        %v573 = vadd.f32 0.0, %v572
        %574 = vmatmul.bf16.gmra.mxu0 %v510
        %v575 = vpop.f32.mrf.mxu0
        %v576 = vadd.f32 0.0, %v575
        %v577 = vpop.f32.mrf.mxu0
        %v578 = vadd.f32 0.0, %v577
        %579 = vmatmul.bf16.gmra.mxu0 %v513
        %v580 = vpop.f32.mrf.mxu0
        %v581 = vadd.f32 0.0, %v580
        %v582 = vpop.f32.mrf.mxu0
        %v583 = vadd.f32 0.0, %v582
        %584 = vmatmul.bf16.gmra.mxu0 %v516
        %v585 = vpop.f32.mrf.mxu0
        %v586 = vadd.f32 0.0, %v585
        %v587 = vpop.f32.mrf.mxu0
        %v588 = vadd.f32 0.0, %v587
        %589 = vmatmul.bf16.gmra.mxu0 %v519
        %v590 = vpop.f32.mrf.mxu0
        %v591 = vadd.f32 0.0, %v590
        %v592 = vpop.f32.mrf.mxu0
        %v593 = vadd.f32 0.0, %v592
        %594 = vmatmul.bf16.gmra.mxu0 %v522
        %v595 = vpop.f32.mrf.mxu0
        %v596 = vadd.f32 0.0, %v595
        %v597 = vpop.f32.mrf.mxu0
        %v598 = vadd.f32 0.0, %v597
        %599 = vmatmul.bf16.gmra.mxu0 %v525
        %v600 = vpop.f32.mrf.mxu0
        %v601 = vadd.f32 0.0, %v600
        %v602 = vpop.f32.mrf.mxu0
        %v603 = vadd.f32 0.0, %v602
        %604 = vmatmul.bf16.gmra.mxu0 %v528
        %v605 = vpop.f32.mrf.mxu0
        %v606 = vadd.f32 0.0, %v605
        %v607 = vpop.f32.mrf.mxu0
        %v608 = vadd.f32 0.0, %v607
        %609 = vmatmul.bf16.gmra.mxu0 %v531
        %v610 = vpop.f32.mrf.mxu0
        %v611 = vadd.f32 0.0, %v610
        %v612 = vpop.f32.mrf.mxu0
        %v613 = vadd.f32 0.0, %v612
        %614 = vmatmul.bf16.gmra.mxu0 %v534
        %v615 = vpop.f32.mrf.mxu0
        %v616 = vadd.f32 0.0, %v615
        %v617 = vpop.f32.mrf.mxu0
        %v618 = vadd.f32 0.0, %v617
        %619 = vmatmul.bf16.gmra.mxu0 %v537
        %v620 = vpop.f32.mrf.mxu0
        %v621 = vadd.f32 0.0, %v620
        %v622 = vpop.f32.mrf.mxu0
        %v623 = vadd.f32 0.0, %v622
        %624 = vmatmul.bf16.gmra.mxu0 %v540
        %v625 = vpop.f32.mrf.mxu0
        %v626 = vadd.f32 0.0, %v625
        %v627 = vpop.f32.mrf.mxu0
        %v628 = vadd.f32 0.0, %v627
        %629 = vmatmul.bf16.gmra.mxu0 %v543
        %v630 = vpop.f32.mrf.mxu0
        %v631 = vadd.f32 0.0, %v630
        %v632 = vpop.f32.mrf.mxu0
        %v633 = vadd.f32 0.0, %v632
        %634 = vmatmul.bf16.gmra.mxu0 %v546
        %v635 = vpop.f32.mrf.mxu0
        %v636 = vadd.f32 0.0, %v635
        %v637 = vpop.f32.mrf.mxu0
        %v638 = vadd.f32 0.0, %v637
        %639 = vmatmul.bf16.gmra.mxu0 %v549
        %v640 = vpop.f32.mrf.mxu0
        %v641 = vadd.f32 0.0, %v640
        %v642 = vpop.f32.mrf.mxu0
        %v643 = vadd.f32 0.0, %v642
        %644 = vdwg.mxu0
        %645 = vmatpush.bf16.msra.mxu0 0
        %646 = vmatpush.bf16.msra.mxu0 0
        %647 = vmatpush.bf16.msra.mxu0 0
        %648 = vmatpush.bf16.msra.mxu0 0
        %649 = vmatpush.bf16.msra.mxu0 0
        %650 = vmatpush.bf16.msra.mxu0 0
        %651 = vmatpush.bf16.msra.mxu0 0
        %652 = vmatpush.bf16.msra.mxu0 %v554
        %653 = vmatmul.bf16.gmra.mxu0 %v504
        %v654 = vpop.f32.mrf.mxu0
        %v655 = vadd.f32 0.0, %v654
        %v656 = vpop.f32.mrf.mxu0
        %v657 = vadd.f32 0.0, %v656
        %658 = vmatmul.bf16.gmra.mxu0 %v507
        %v659 = vpop.f32.mrf.mxu0
        %v660 = vadd.f32 0.0, %v659
        %v661 = vpop.f32.mrf.mxu0
        %v662 = vadd.f32 0.0, %v661
        %663 = vmatmul.bf16.gmra.mxu0 %v510
        %v664 = vpop.f32.mrf.mxu0
        %v665 = vadd.f32 0.0, %v664
        %v666 = vpop.f32.mrf.mxu0
        %v667 = vadd.f32 0.0, %v666
        %668 = vmatmul.bf16.gmra.mxu0 %v513
        %v669 = vpop.f32.mrf.mxu0
        %v670 = vadd.f32 0.0, %v669
        %v671 = vpop.f32.mrf.mxu0
        %v672 = vadd.f32 0.0, %v671
        %673 = vmatmul.bf16.gmra.mxu0 %v516
        %v674 = vpop.f32.mrf.mxu0
        %v675 = vadd.f32 0.0, %v674
        %v676 = vpop.f32.mrf.mxu0
        %v677 = vadd.f32 0.0, %v676
        %678 = vmatmul.bf16.gmra.mxu0 %v519
        %v679 = vpop.f32.mrf.mxu0
        %v680 = vadd.f32 0.0, %v679
        %v681 = vpop.f32.mrf.mxu0
        %v682 = vadd.f32 0.0, %v681
        %683 = vmatmul.bf16.gmra.mxu0 %v522
        %v684 = vpop.f32.mrf.mxu0
        %v685 = vadd.f32 0.0, %v684
        %v686 = vpop.f32.mrf.mxu0
        %v687 = vadd.f32 0.0, %v686
        %688 = vmatmul.bf16.gmra.mxu0 %v525
        %v689 = vpop.f32.mrf.mxu0
        %v690 = vadd.f32 0.0, %v689
        %v691 = vpop.f32.mrf.mxu0
        %v692 = vadd.f32 0.0, %v691
        %693 = vmatmul.bf16.gmra.mxu0 %v528
        %v694 = vpop.f32.mrf.mxu0
        %v695 = vadd.f32 0.0, %v694
        %v696 = vpop.f32.mrf.mxu0
        %v697 = vadd.f32 0.0, %v696
        %698 = vmatmul.bf16.gmra.mxu0 %v531
        %v699 = vpop.f32.mrf.mxu0
        %v700 = vadd.f32 0.0, %v699
        %v701 = vpop.f32.mrf.mxu0
        %v702 = vadd.f32 0.0, %v701
        %703 = vmatmul.bf16.gmra.mxu0 %v534
        %v704 = vpop.f32.mrf.mxu0
        %v705 = vadd.f32 0.0, %v704
        %v706 = vpop.f32.mrf.mxu0
        %v707 = vadd.f32 0.0, %v706
        %708 = vmatmul.bf16.gmra.mxu0 %v537
        %v709 = vpop.f32.mrf.mxu0
        %v710 = vadd.f32 0.0, %v709
        %v711 = vpop.f32.mrf.mxu0
        %v712 = vadd.f32 0.0, %v711
        %713 = vmatmul.bf16.gmra.mxu0 %v540
        %v714 = vpop.f32.mrf.mxu0
        %v715 = vadd.f32 0.0, %v714
        %v716 = vpop.f32.mrf.mxu0
        %v717 = vadd.f32 0.0, %v716
        %718 = vmatmul.bf16.gmra.mxu0 %v543
        %v719 = vpop.f32.mrf.mxu0
        %v720 = vadd.f32 0.0, %v719
        %v721 = vpop.f32.mrf.mxu0
        %v722 = vadd.f32 0.0, %v721
        %723 = vmatmul.bf16.gmra.mxu0 %v546
        %v724 = vpop.f32.mrf.mxu0
        %v725 = vadd.f32 0.0, %v724
        %v726 = vpop.f32.mrf.mxu0
        %v727 = vadd.f32 0.0, %v726
        %728 = vmatmul.bf16.gmra.mxu0 %v549
        %v729 = vpop.f32.mrf.mxu0
        %v730 = vadd.f32 0.0, %v729
        %v731 = vpop.f32.mrf.mxu0
        %v732 = vadd.f32 0.0, %v731
        %733 = vdwg.mxu0
        %v734 = vld [vmem:[#allocation2] sm:$0x3]
        %v735 = vmax.f32 %v566, %v571
        %v736 = vmax.f32 %v568, %v573
        %v737 = vmax.f32 %v735, %v576
        %v738 = vmax.f32 %v736, %v578
        %v739 = vmax.f32 %v737, %v581
        %v740 = vmax.f32 %v738, %v583
        %v741 = vmax.f32 %v739, %v586
        %v742 = vmax.f32 %v740, %v588
        %v743 = vmax.f32 %v741, %v591
        %v744 = vmax.f32 %v742, %v593
        %v745 = vmax.f32 %v743, %v596
        %v746 = vmax.f32 %v744, %v598
        %v747 = vmax.f32 %v745, %v601
        %v748 = vmax.f32 %v746, %v603
        %v749 = vmax.f32 %v747, %v606
        %v750 = vmax.f32 %v748, %v608
        %v751 = vmax.f32 %v749, %v611
        %v752 = vmax.f32 %v750, %v613
        %v753 = vmax.f32 %v751, %v616
        %v754 = vmax.f32 %v752, %v618
        %v755 = vmax.f32 %v753, %v621
        %v756 = vmax.f32 %v754, %v623
        %v757 = vmax.f32 %v755, %v626
        %v758 = vmax.f32 %v756, %v628
        %v759 = vmax.f32 %v757, %v631
        %v760 = vmax.f32 %v758, %v633
        %v761 = vmax.f32 %v759, %v636
        %v762 = vmax.f32 %v760, %v638
        %v763 = vmax.f32 %v761, %v641
        %v764 = vmax.f32 %v762, %v643
        %v765 = vmax.f32 %v763, %v764
        %v766 = vrot.slane %v765, 4
        %v767 = vmax.f32 %v765, %v766
        %v768 = vrot.slane %v767, 2
        %v769 = vmax.f32 %v767, %v768
        %v770 = vrot.slane %v769, 1
        %v771 = vmax.f32 %v769, %v770
        %v772 = vmax.f32 %v655, %v660
        %v773 = vmax.f32 %v657, %v662
        %v774 = vmax.f32 %v772, %v665
        %v775 = vmax.f32 %v773, %v667
        %v776 = vmax.f32 %v774, %v670
        %v777 = vmax.f32 %v775, %v672
        %v778 = vmax.f32 %v776, %v675
        %v779 = vmax.f32 %v777, %v677
        %v780 = vmax.f32 %v778, %v680
        %v781 = vmax.f32 %v779, %v682
        %v782 = vmax.f32 %v780, %v685
        %v783 = vmax.f32 %v781, %v687
        %v784 = vmax.f32 %v782, %v690
        %v785 = vmax.f32 %v783, %v692
        %v786 = vmax.f32 %v784, %v695
        %v787 = vmax.f32 %v785, %v697
        %v788 = vmax.f32 %v786, %v700
        %v789 = vmax.f32 %v787, %v702
        %v790 = vmax.f32 %v788, %v705
        %v791 = vmax.f32 %v789, %v707
        %v792 = vmax.f32 %v790, %v710
        %v793 = vmax.f32 %v791, %v712
        %v794 = vmax.f32 %v792, %v715
        %v795 = vmax.f32 %v793, %v717
        %v796 = vmax.f32 %v794, %v720
        %v797 = vmax.f32 %v795, %v722
        %v798 = vmax.f32 %v796, %v725
        %v799 = vmax.f32 %v797, %v727
        %v800 = vmax.f32 %v798, %v730
        %v801 = vmax.f32 %v799, %v732
        %v802 = vmax.f32 %v800, %v801
        %v803 = vrot.slane %v802, 4
        %v804 = vmax.f32 %v802, %v803
        %v805 = vrot.slane %v804, 2
        %v806 = vmax.f32 %v804, %v805
        %v807 = vrot.slane %v806, 1
        %v808 = vmax.f32 %v806, %v807
        %v811 = vrot.slane %v808, 7
        %vm812 = vcmask 1040384
        %v813 = vsel %vm812, %v771, %v811
        %v815 = vmax.f32 %v734, %v813
        %v816 = vsub.f32 %v734, %v815
        %v817 = vmul.f32 %v816, 1.442695
        %v818 = vpow.pop %v817
        %v820 = vperm.slane %v815, 0
        %v821 = vperm.slane %v815, 1
        %v824 = vsub.f32 %v566, %v820
        %v825 = vsub.f32 %v655, %v821
        %v826 = vsub.f32 %v568, %v820
        %v827 = vsub.f32 %v657, %v821
        %v828 = vsub.f32 %v571, %v820
        %v829 = vsub.f32 %v660, %v821
        %v830 = vsub.f32 %v573, %v820
        %v831 = vsub.f32 %v662, %v821
        %v832 = vsub.f32 %v576, %v820
        %v833 = vsub.f32 %v665, %v821
        %v834 = vsub.f32 %v578, %v820
        %v835 = vsub.f32 %v667, %v821
        %v836 = vsub.f32 %v581, %v820
        %v837 = vsub.f32 %v670, %v821
        %v838 = vsub.f32 %v583, %v820
        %v839 = vsub.f32 %v672, %v821
        %v840 = vsub.f32 %v586, %v820
        %v841 = vsub.f32 %v675, %v821
        %v842 = vsub.f32 %v588, %v820
        %v843 = vsub.f32 %v677, %v821
        %v844 = vsub.f32 %v591, %v820
        %v845 = vsub.f32 %v680, %v821
        %v846 = vsub.f32 %v593, %v820
        %v847 = vsub.f32 %v682, %v821
        %v848 = vsub.f32 %v596, %v820
        %v849 = vsub.f32 %v685, %v821
        %v850 = vsub.f32 %v598, %v820
        %v851 = vsub.f32 %v687, %v821
        %v852 = vsub.f32 %v601, %v820
        %v853 = vsub.f32 %v690, %v821
        %v854 = vsub.f32 %v603, %v820
        %v855 = vsub.f32 %v692, %v821
        %v856 = vsub.f32 %v606, %v820
        %v857 = vsub.f32 %v695, %v821
        %v858 = vsub.f32 %v608, %v820
        %v859 = vsub.f32 %v697, %v821
        %v860 = vsub.f32 %v611, %v820
        %v861 = vsub.f32 %v700, %v821
        %v862 = vsub.f32 %v613, %v820
        %v863 = vsub.f32 %v702, %v821
        %v864 = vsub.f32 %v616, %v820
        %v865 = vsub.f32 %v705, %v821
        %v866 = vsub.f32 %v618, %v820
        %v867 = vsub.f32 %v707, %v821
        %v868 = vsub.f32 %v621, %v820
        %v869 = vsub.f32 %v710, %v821
        %v870 = vsub.f32 %v623, %v820
        %v871 = vsub.f32 %v712, %v821
        %v872 = vsub.f32 %v626, %v820
        %v873 = vsub.f32 %v715, %v821
        %v874 = vsub.f32 %v628, %v820
        %v875 = vsub.f32 %v717, %v821
        %v876 = vsub.f32 %v631, %v820
        %v877 = vsub.f32 %v720, %v821
        %v878 = vsub.f32 %v633, %v820
        %v879 = vsub.f32 %v722, %v821
        %v880 = vsub.f32 %v636, %v820
        %v881 = vsub.f32 %v725, %v821
        %v882 = vsub.f32 %v638, %v820
        %v883 = vsub.f32 %v727, %v821
        %v884 = vsub.f32 %v641, %v820
        %v885 = vsub.f32 %v730, %v821
        %v886 = vsub.f32 %v643, %v820
        %v887 = vsub.f32 %v732, %v821
        %v888 = vmul.f32 %v824, 1.442695
        %v889 = vpow.pop %v888
        %v890 = vmul.f32 %v825, 1.442695
        %v891 = vpow.pop %v890
        %v892 = vmul.f32 %v826, 1.442695
        %v893 = vpow.pop %v892
        %v894 = vmul.f32 %v827, 1.442695
        %v895 = vpow.pop %v894
        %v896 = vmul.f32 %v828, 1.442695
        %v897 = vpow.pop %v896
        %v898 = vmul.f32 %v829, 1.442695
        %v899 = vpow.pop %v898
        %v900 = vmul.f32 %v830, 1.442695
        %v901 = vpow.pop %v900
        %v902 = vmul.f32 %v831, 1.442695
        %v903 = vpow.pop %v902
        %v904 = vmul.f32 %v832, 1.442695
        %v905 = vpow.pop %v904
        %v906 = vmul.f32 %v833, 1.442695
        %v907 = vpow.pop %v906
        %v908 = vmul.f32 %v834, 1.442695
        %v909 = vpow.pop %v908
        %v910 = vmul.f32 %v835, 1.442695
        %v911 = vpow.pop %v910
        %v912 = vmul.f32 %v836, 1.442695
        %v913 = vpow.pop %v912
        %v914 = vmul.f32 %v837, 1.442695
        %v915 = vpow.pop %v914
        %v916 = vmul.f32 %v838, 1.442695
        %v917 = vpow.pop %v916
        %v918 = vmul.f32 %v839, 1.442695
        %v919 = vpow.pop %v918
        %v920 = vmul.f32 %v840, 1.442695
        %v921 = vpow.pop %v920
        %v922 = vmul.f32 %v841, 1.442695
        %v923 = vpow.pop %v922
        %v924 = vmul.f32 %v842, 1.442695
        %v925 = vpow.pop %v924
        %v926 = vmul.f32 %v843, 1.442695
        %v927 = vpow.pop %v926
        %v928 = vmul.f32 %v844, 1.442695
        %v929 = vpow.pop %v928
        %v930 = vmul.f32 %v845, 1.442695
        %v931 = vpow.pop %v930
        %v932 = vmul.f32 %v846, 1.442695
        %v933 = vpow.pop %v932
        %v934 = vmul.f32 %v847, 1.442695
        %v935 = vpow.pop %v934
        %v936 = vmul.f32 %v848, 1.442695
        %v937 = vpow.pop %v936
        %v938 = vmul.f32 %v849, 1.442695
        %v939 = vpow.pop %v938
        %v940 = vmul.f32 %v850, 1.442695
        %v941 = vpow.pop %v940
        %v942 = vmul.f32 %v851, 1.442695
        %v943 = vpow.pop %v942
        %v944 = vmul.f32 %v852, 1.442695
        %v945 = vpow.pop %v944
        %v946 = vmul.f32 %v853, 1.442695
        %v947 = vpow.pop %v946
        %v948 = vmul.f32 %v854, 1.442695
        %v949 = vpow.pop %v948
        %v950 = vmul.f32 %v855, 1.442695
        %v951 = vpow.pop %v950
        %v952 = vmul.f32 %v856, 1.442695
        %v953 = vpow.pop %v952
        %v954 = vmul.f32 %v857, 1.442695
        %v955 = vpow.pop %v954
        %v956 = vmul.f32 %v858, 1.442695
        %v957 = vpow.pop %v956
        %v958 = vmul.f32 %v859, 1.442695
        %v959 = vpow.pop %v958
        %v960 = vmul.f32 %v860, 1.442695
        %v961 = vpow.pop %v960
        %v962 = vmul.f32 %v861, 1.442695
        %v963 = vpow.pop %v962
        %v964 = vmul.f32 %v862, 1.442695
        %v965 = vpow.pop %v964
        %v966 = vmul.f32 %v863, 1.442695
        %v967 = vpow.pop %v966
        %v968 = vmul.f32 %v864, 1.442695
        %v969 = vpow.pop %v968
        %v970 = vmul.f32 %v865, 1.442695
        %v971 = vpow.pop %v970
        %v972 = vmul.f32 %v866, 1.442695
        %v973 = vpow.pop %v972
        %v974 = vmul.f32 %v867, 1.442695
        %v975 = vpow.pop %v974
        %v976 = vmul.f32 %v868, 1.442695
        %v977 = vpow.pop %v976
        %v978 = vmul.f32 %v869, 1.442695
        %v979 = vpow.pop %v978
        %v980 = vmul.f32 %v870, 1.442695
        %v981 = vpow.pop %v980
        %v982 = vmul.f32 %v871, 1.442695
        %v983 = vpow.pop %v982
        %v984 = vmul.f32 %v872, 1.442695
        %v985 = vpow.pop %v984
        %v986 = vmul.f32 %v873, 1.442695
        %v987 = vpow.pop %v986
        %v988 = vmul.f32 %v874, 1.442695
        %v989 = vpow.pop %v988
        %v990 = vmul.f32 %v875, 1.442695
        %v991 = vpow.pop %v990
        %v992 = vmul.f32 %v876, 1.442695
        %v993 = vpow.pop %v992
        %v994 = vmul.f32 %v877, 1.442695
        %v995 = vpow.pop %v994
        %v996 = vmul.f32 %v878, 1.442695
        %v997 = vpow.pop %v996
        %v998 = vmul.f32 %v879, 1.442695
        %v999 = vpow.pop %v998
        %v1000 = vmul.f32 %v880, 1.442695
        %v1001 = vpow.pop %v1000
        %v1002 = vmul.f32 %v881, 1.442695
        %v1003 = vpow.pop %v1002
        %v1004 = vmul.f32 %v882, 1.442695
        %v1005 = vpow.pop %v1004
        %v1006 = vmul.f32 %v883, 1.442695
        %v1007 = vpow.pop %v1006
        %v1008 = vmul.f32 %v884, 1.442695
        %v1009 = vpow.pop %v1008
        %v1010 = vmul.f32 %v885, 1.442695
        %v1011 = vpow.pop %v1010
        %v1012 = vmul.f32 %v886, 1.442695
        %v1013 = vpow.pop %v1012
        %v1014 = vmul.f32 %v887, 1.442695
        %v1015 = vpow.pop %v1014
        %v1016 = vld [vmem:[#allocation3] sm:$0x3]
        %v1017 = vmul.f32 %v818, %v1016
        %v1018 = vadd.f32 %v889, %v893
        %v1019 = vadd.f32 %v1018, %v897
        %v1020 = vadd.f32 %v1019, %v901
        %v1021 = vadd.f32 %v1020, %v905
        %v1022 = vadd.f32 %v1021, %v909
        %v1023 = vadd.f32 %v1022, %v913
        %v1024 = vadd.f32 %v1023, %v917
        %v1025 = vadd.f32 %v1024, %v921
        %v1026 = vadd.f32 %v1025, %v925
        %v1027 = vadd.f32 %v1026, %v929
        %v1028 = vadd.f32 %v1027, %v933
        %v1029 = vadd.f32 %v1028, %v937
        %v1030 = vadd.f32 %v1029, %v941
        %v1031 = vadd.f32 %v1030, %v945
        %v1032 = vadd.f32 %v1031, %v949
        %v1033 = vadd.f32 %v1032, %v953
        %v1034 = vadd.f32 %v1033, %v957
        %v1035 = vadd.f32 %v1034, %v961
        %v1036 = vadd.f32 %v1035, %v965
        %v1037 = vadd.f32 %v1036, %v969
        %v1038 = vadd.f32 %v1037, %v973
        %v1039 = vadd.f32 %v1038, %v977
        %v1040 = vadd.f32 %v1039, %v981
        %v1041 = vadd.f32 %v1040, %v985
        %v1042 = vadd.f32 %v1041, %v989
        %v1043 = vadd.f32 %v1042, %v993
        %v1044 = vadd.f32 %v1043, %v997
        %v1045 = vadd.f32 %v1044, %v1001
        %v1046 = vadd.f32 %v1045, %v1005
        %v1047 = vadd.f32 %v1046, %v1009
        %v1048 = vadd.f32 %v1047, %v1013
        %v1049 = vrot.slane %v1048, 4
        %v1050 = vadd.f32 %v1048, %v1049
        %v1051 = vrot.slane %v1050, 2
        %v1052 = vadd.f32 %v1050, %v1051
        %v1053 = vrot.slane %v1052, 1
        %v1054 = vadd.f32 %v1052, %v1053
        %v1055 = vadd.f32 %v891, %v895
        %v1056 = vadd.f32 %v1055, %v899
        %v1057 = vadd.f32 %v1056, %v903
        %v1058 = vadd.f32 %v1057, %v907
        %v1059 = vadd.f32 %v1058, %v911
        %v1060 = vadd.f32 %v1059, %v915
        %v1061 = vadd.f32 %v1060, %v919
        %v1062 = vadd.f32 %v1061, %v923
        %v1063 = vadd.f32 %v1062, %v927
        %v1064 = vadd.f32 %v1063, %v931
        %v1065 = vadd.f32 %v1064, %v935
        %v1066 = vadd.f32 %v1065, %v939
        %v1067 = vadd.f32 %v1066, %v943
        %v1068 = vadd.f32 %v1067, %v947
        %v1069 = vadd.f32 %v1068, %v951
        %v1070 = vadd.f32 %v1069, %v955
        %v1071 = vadd.f32 %v1070, %v959
        %v1072 = vadd.f32 %v1071, %v963
        %v1073 = vadd.f32 %v1072, %v967
        %v1074 = vadd.f32 %v1073, %v971
        %v1075 = vadd.f32 %v1074, %v975
        %v1076 = vadd.f32 %v1075, %v979
        %v1077 = vadd.f32 %v1076, %v983
        %v1078 = vadd.f32 %v1077, %v987
        %v1079 = vadd.f32 %v1078, %v991
        %v1080 = vadd.f32 %v1079, %v995
        %v1081 = vadd.f32 %v1080, %v999
        %v1082 = vadd.f32 %v1081, %v1003
        %v1083 = vadd.f32 %v1082, %v1007
        %v1084 = vadd.f32 %v1083, %v1011
        %v1085 = vadd.f32 %v1084, %v1015
        %v1086 = vrot.slane %v1085, 4
        %v1087 = vadd.f32 %v1085, %v1086
        %v1088 = vrot.slane %v1087, 2
        %v1089 = vadd.f32 %v1087, %v1088
        %v1090 = vrot.slane %v1089, 1
        %v1091 = vadd.f32 %v1089, %v1090
        %v1094 = vrot.slane %v1091, 7
        %v1095 = vsel %vm812, %v1054, %v1094
        %v1097 = vadd.f32 %v1017, %v1095
        %v1098 = vlaneseq
        %vm1099 = vcmp.ge.s32.totalorder %v1098, 0
        %vm1100 = vcmp.lt.s32.totalorder %v1098, 256
        %vm1101 = vmand %vm1099, %vm1100
        %1102 = vst.msk [vmem:[#allocation3] sm:$0x3] %vm1101, %v1097
        %v1103 = vld [vmem:[#allocation4] sm:$0xff]
        %v1104 = vld [vmem:[#allocation4 + $0x8] sm:$0xff]
        %v1105 = vld [vmem:[#allocation4 + $0x10] sm:$0xff]
        %v1106 = vld [vmem:[#allocation4 + $0x18] sm:$0xff]
        %v1107 = vld [vmem:[#allocation4 + $0x20] sm:$0xff]
        %v1108 = vld [vmem:[#allocation4 + $0x28] sm:$0xff]
        %v1109 = vld [vmem:[#allocation4 + $0x30] sm:$0xff]
        %v1110 = vld [vmem:[#allocation4 + $0x38] sm:$0xff]
        %v1112 = vperm.slane %v818, 0
        %v1113 = vperm.slane %v818, 1
        %v1116 = vmul.f32 %v1112, %v1103
        %v1117 = vmul.f32 %v1113, %v1104
        %v1118 = vmul.f32 %v1112, %v1105
        %v1119 = vmul.f32 %v1113, %v1106
        %v1120 = vmul.f32 %v1112, %v1107
        %v1121 = vmul.f32 %v1113, %v1108
        %v1122 = vmul.f32 %v1112, %v1109
        %v1123 = vmul.f32 %v1113, %v1110
        %v1124 = vpack.c.bf16 %v893, %v889
        %v1125 = vpack.c.bf16 %v895, %v891
        %v1126 = vpack.c.bf16 %v901, %v897
        %v1127 = vpack.c.bf16 %v903, %v899
        %v1128 = vpack.c.bf16 %v909, %v905
        %v1129 = vpack.c.bf16 %v911, %v907
        %v1130 = vpack.c.bf16 %v917, %v913
        %v1131 = vpack.c.bf16 %v919, %v915
        %v1132 = vpack.c.bf16 %v925, %v921
        %v1133 = vpack.c.bf16 %v927, %v923
        %v1134 = vpack.c.bf16 %v933, %v929
        %v1135 = vpack.c.bf16 %v935, %v931
        %v1136 = vpack.c.bf16 %v941, %v937
        %v1137 = vpack.c.bf16 %v943, %v939
        %v1138 = vpack.c.bf16 %v949, %v945
        %v1139 = vpack.c.bf16 %v951, %v947
        %v1140 = vpack.c.bf16 %v957, %v953
        %v1141 = vpack.c.bf16 %v959, %v955
        %v1142 = vpack.c.bf16 %v965, %v961
        %v1143 = vpack.c.bf16 %v967, %v963
        %v1144 = vpack.c.bf16 %v973, %v969
        %v1145 = vpack.c.bf16 %v975, %v971
        %v1146 = vpack.c.bf16 %v981, %v977
        %v1147 = vpack.c.bf16 %v983, %v979
        %v1148 = vpack.c.bf16 %v989, %v985
        %v1149 = vpack.c.bf16 %v991, %v987
        %v1150 = vpack.c.bf16 %v997, %v993
        %v1151 = vpack.c.bf16 %v999, %v995
        %v1152 = vpack.c.bf16 %v1005, %v1001
        %v1153 = vpack.c.bf16 %v1007, %v1003
        %v1154 = vpack.c.bf16 %v1013, %v1009
        %v1155 = vpack.c.bf16 %v1015, %v1011
        %v1160 = vunpack.c.l.b16 %v464
        %v1161 = vunpack.c.h.b16 %v464
        %v1162 = vunpack.c.l.b16 %v465
        %v1163 = vunpack.c.h.b16 %v465
        %v1164 = vunpack.c.l.b16 %v466
        %v1165 = vunpack.c.h.b16 %v466
        %v1166 = vunpack.c.l.b16 %v467
        %v1167 = vunpack.c.h.b16 %v467
        %v1168 = vpack.c.b16 %v1162, %v1160
        %v1169 = vpack.c.b16 %v1163, %v1161
        %v1170 = vpack.c.b16 %v1166, %v1164
        %v1171 = vpack.c.b16 %v1167, %v1165
        %1176 = vmatpush.bf16.msra.mxu0 %v1138
        %1177 = vmatpush.bf16.msra.mxu0 %v1136
        %1178 = vmatpush.bf16.msra.mxu0 %v1134
        %1179 = vmatpush.bf16.msra.mxu0 %v1132
        %1180 = vmatpush.bf16.msra.mxu0 %v1130
        %1181 = vmatpush.bf16.msra.mxu0 %v1128
        %1182 = vmatpush.bf16.msra.mxu0 %v1126
        %1183 = vmatpush.bf16.msra.mxu0 %v1124
        %1184 = vmatmul.bf16.gmra.mxu0 %v1168
        %v1185 = vpop.f32.mrf.mxu0
        %v1186 = vadd.f32 0.0, %v1185
        %v1187 = vpop.f32.mrf.mxu0
        %v1188 = vadd.f32 0.0, %v1187
        %1189 = vmatmul.bf16.gmra.mxu0 %v1170
        %v1190 = vpop.f32.mrf.mxu0
        %v1191 = vadd.f32 0.0, %v1190
        %v1192 = vpop.f32.mrf.mxu0
        %v1193 = vadd.f32 0.0, %v1192
        %1194 = vdwg.mxu0
        %1195 = vmatpush.bf16.msra.mxu0 %v1154
        %1196 = vmatpush.bf16.msra.mxu0 %v1152
        %1197 = vmatpush.bf16.msra.mxu0 %v1150
        %1198 = vmatpush.bf16.msra.mxu0 %v1148
        %1199 = vmatpush.bf16.msra.mxu0 %v1146
        %1200 = vmatpush.bf16.msra.mxu0 %v1144
        %1201 = vmatpush.bf16.msra.mxu0 %v1142
        %1202 = vmatpush.bf16.msra.mxu0 %v1140
        %1203 = vmatmul.bf16.gmra.mxu0 %v1169
        %v1204 = vpop.f32.mrf.mxu0
        %v1205 = vadd.f32 %v1186, %v1204
        %v1206 = vpop.f32.mrf.mxu0
        %v1207 = vadd.f32 %v1188, %v1206
        %1208 = vmatmul.bf16.gmra.mxu0 %v1171
        %v1209 = vpop.f32.mrf.mxu0
        %v1210 = vadd.f32 %v1191, %v1209
        %v1211 = vpop.f32.mrf.mxu0
        %v1212 = vadd.f32 %v1193, %v1211
        %1213 = vdwg.mxu0
        %1214 = vmatpush.bf16.msra.mxu0 %v1139
        %1215 = vmatpush.bf16.msra.mxu0 %v1137
        %1216 = vmatpush.bf16.msra.mxu0 %v1135
        %1217 = vmatpush.bf16.msra.mxu0 %v1133
        %1218 = vmatpush.bf16.msra.mxu0 %v1131
        %1219 = vmatpush.bf16.msra.mxu0 %v1129
        %1220 = vmatpush.bf16.msra.mxu0 %v1127
        %1221 = vmatpush.bf16.msra.mxu0 %v1125
        %1222 = vmatmul.bf16.gmra.mxu0 %v1168
        %v1223 = vpop.f32.mrf.mxu0
        %v1224 = vadd.f32 0.0, %v1223
        %v1225 = vpop.f32.mrf.mxu0
        %v1226 = vadd.f32 0.0, %v1225
        %1227 = vmatmul.bf16.gmra.mxu0 %v1170
        %v1228 = vpop.f32.mrf.mxu0
        %v1229 = vadd.f32 0.0, %v1228
        %v1230 = vpop.f32.mrf.mxu0
        %v1231 = vadd.f32 0.0, %v1230
        %1232 = vdwg.mxu0
        %1233 = vmatpush.bf16.msra.mxu0 %v1155
        %1234 = vmatpush.bf16.msra.mxu0 %v1153
        %1235 = vmatpush.bf16.msra.mxu0 %v1151
        %1236 = vmatpush.bf16.msra.mxu0 %v1149
        %1237 = vmatpush.bf16.msra.mxu0 %v1147
        %1238 = vmatpush.bf16.msra.mxu0 %v1145
        %1239 = vmatpush.bf16.msra.mxu0 %v1143
        %1240 = vmatpush.bf16.msra.mxu0 %v1141
        %1241 = vmatmul.bf16.gmra.mxu0 %v1169
        %v1242 = vpop.f32.mrf.mxu0
        %v1243 = vadd.f32 %v1224, %v1242
        %v1244 = vpop.f32.mrf.mxu0
        %v1245 = vadd.f32 %v1226, %v1244
        %1246 = vmatmul.bf16.gmra.mxu0 %v1171
        %v1247 = vpop.f32.mrf.mxu0
        %v1248 = vadd.f32 %v1229, %v1247
        %v1249 = vpop.f32.mrf.mxu0
        %v1250 = vadd.f32 %v1231, %v1249
        %1251 = vdwg.mxu0
        %v1252 = vadd.f32 %v1116, %v1205
        %v1253 = vadd.f32 %v1117, %v1243
        %v1254 = vadd.f32 %v1118, %v1207
        %v1255 = vadd.f32 %v1119, %v1245
        %v1256 = vadd.f32 %v1120, %v1210
        %v1257 = vadd.f32 %v1121, %v1248
        %v1258 = vadd.f32 %v1122, %v1212
        %v1259 = vadd.f32 %v1123, %v1250
        %1260 = vst [vmem:[#allocation4] sm:$0xff] %v1252
        %1261 = vst [vmem:[#allocation4 + $0x8] sm:$0xff] %v1253
        %1262 = vst [vmem:[#allocation4 + $0x10] sm:$0xff] %v1254
        %1263 = vst [vmem:[#allocation4 + $0x18] sm:$0xff] %v1255
        %1264 = vst [vmem:[#allocation4 + $0x20] sm:$0xff] %v1256
        %1265 = vst [vmem:[#allocation4 + $0x28] sm:$0xff] %v1257
        %1266 = vst [vmem:[#allocation4 + $0x30] sm:$0xff] %v1258
        %1267 = vst [vmem:[#allocation4 + $0x38] sm:$0xff] %v1259
        %1268 = vst.msk [vmem:[#allocation2] sm:$0x3] %vm1101, %v815
        // Predicated region
        $region61: #{tpu_custom_call.1} parent=43 // pred_check
          %p1269 = pneg %p444
        $region62: #{tpu_custom_call.1} parent=43 // pred_check_branch
          %1271 = sbr.rel (%p1269) target = $region64
        $region63: #{tpu_custom_call.1} parent=43 // pred_region
          %v1272 = vld [vmem:[#allocation3] sm:$0x3]
          %v1273 = vrcp.pop %v1272
          %v1274 = vmul.f32 %v1272, %v1273
          %v1275 = vsub.f32 1.0, %v1274
          %v1276 = vmul.f32 %v1273, %v1275
          %v1277 = vadd.f32 %v1273, %v1276
          %vm1278 = vweird.f32 %v1272
          %vm1279 = vweird.f32 %v1273
          %vm1280 = vmor %vm1278, %vm1279
          %v1281 = vsel %vm1280, %v1273, %v1277
          %v1282 = vand.u32 2147483647, %v1272
          %vm1283 = vcmp.eq.f32.partialorder %v1282, 8.507059e+37
          %v1284 = vand.u32 %v1272, 2147483648
          %v1285 = vor.u32 1.1754944e-38, %v1284
          %v1286 = vsel %vm1283, %v1285, %v1281
          %v1287 = vmul.f32 1.0, %v1286
          %v1288 = vld [vmem:[#allocation4] sm:$0xff]
          %v1289 = vld [vmem:[#allocation4 + $0x8] sm:$0xff]
          %v1290 = vld [vmem:[#allocation4 + $0x10] sm:$0xff]
          %v1291 = vld [vmem:[#allocation4 + $0x18] sm:$0xff]
          %v1292 = vld [vmem:[#allocation4 + $0x20] sm:$0xff]
          %v1293 = vld [vmem:[#allocation4 + $0x28] sm:$0xff]
          %v1294 = vld [vmem:[#allocation4 + $0x30] sm:$0xff]
          %v1295 = vld [vmem:[#allocation4 + $0x38] sm:$0xff]
          %v1297 = vperm.slane %v1287, 0
          %v1298 = vperm.slane %v1287, 1
          %v1301 = vmul.f32 %v1288, %v1297
          %v1302 = vmul.f32 %v1289, %v1298
          %v1303 = vmul.f32 %v1290, %v1297
          %v1304 = vmul.f32 %v1291, %v1298
          %v1305 = vmul.f32 %v1292, %v1297
          %v1306 = vmul.f32 %v1293, %v1298
          %v1307 = vmul.f32 %v1294, %v1297
          %v1308 = vmul.f32 %v1295, %v1298
          %s1309 = sld [smem:[#allocation5]]
          %v1310 = vld [vmem:[%s441] sm:$0xff]
          %v1311 = vld [vmem:[%s441 + $0x8] sm:$0xff]
          %v1312 = vld [vmem:[%s441 + $0x10] sm:$0xff]
          %v1313 = vld [vmem:[%s441 + $0x18] sm:$0xff]
          %1315 = vset.pattern.permute.xlu0 0
          %1316 = vperm.xlu0 %1315, %v1310
          %v1317 = vpop.permute.xlu0 %1316
          %1320 = vset.pattern.permute.xlu0 0
          %1321 = vperm.xlu0 %1320, %v1311
          %v1322 = vpop.permute.xlu0 %1321
          %1325 = vset.pattern.permute.xlu0 0
          %1326 = vperm.xlu0 %1325, %v1312
          %v1327 = vpop.permute.xlu0 %1326
          %1330 = vset.pattern.permute.xlu0 0
          %1331 = vperm.xlu0 %1330, %v1313
          %v1332 = vpop.permute.xlu0 %1331
          %v1334 = vmul.f32 %v1301, %v1317
          %v1335 = vmul.f32 %v1302, %v1317
          %v1336 = vmul.f32 %v1303, %v1322
          %v1337 = vmul.f32 %v1304, %v1322
          %v1338 = vmul.f32 %v1305, %v1327
          %v1339 = vmul.f32 %v1306, %v1327
          %v1340 = vmul.f32 %v1307, %v1332
          %v1341 = vmul.f32 %v1308, %v1332
          %v1342 = vstv %s1309
          %v1343 = vmul.f32 %v1342, %v1334
          %v1344 = vmul.f32 %v1342, %v1335
          %v1345 = vmul.f32 %v1342, %v1336
          %v1346 = vmul.f32 %v1342, %v1337
          %v1347 = vmul.f32 %v1342, %v1338
          %v1348 = vmul.f32 %v1342, %v1339
          %v1349 = vmul.f32 %v1342, %v1340
          %v1350 = vmul.f32 %v1342, %v1341
          %v1351 = vld [vmem:[%s370] sm:$0xff]
          %v1352 = vld [vmem:[%s370 + $0x8] sm:$0xff]
          %v1353 = vld [vmem:[%s370 + $0x10] sm:$0xff]
          %v1354 = vld [vmem:[%s370 + $0x18] sm:$0xff]
          %v1355 = vld [vmem:[%s370 + $0x20] sm:$0xff]
          %v1356 = vld [vmem:[%s370 + $0x28] sm:$0xff]
          %v1357 = vld [vmem:[%s370 + $0x30] sm:$0xff]
          %v1358 = vld [vmem:[%s370 + $0x38] sm:$0xff]
          %v1359 = vadd.f32 %v1343, %v1351
          %v1360 = vadd.f32 %v1344, %v1352
          %v1361 = vadd.f32 %v1345, %v1353
          %v1362 = vadd.f32 %v1346, %v1354
          %v1363 = vadd.f32 %v1347, %v1355
          %v1364 = vadd.f32 %v1348, %v1356
          %v1365 = vadd.f32 %v1349, %v1357
          %v1366 = vadd.f32 %v1350, %v1358
          %1367 = vst [vmem:[%s423] sm:$0xff] %v1359
          %1368 = vst [vmem:[%s423 + $0x8] sm:$0xff] %v1360
          %1369 = vst [vmem:[%s423 + $0x10] sm:$0xff] %v1361
          %1370 = vst [vmem:[%s423 + $0x18] sm:$0xff] %v1362
          %1371 = vst [vmem:[%s423 + $0x20] sm:$0xff] %v1363
          %1372 = vst [vmem:[%s423 + $0x28] sm:$0xff] %v1364
          %1373 = vst [vmem:[%s423 + $0x30] sm:$0xff] %v1365
          %1374 = vst [vmem:[%s423 + $0x38] sm:$0xff] %v1366
        $region64: #{tpu_custom_call.1} parent=43 // pred_fallthru
          _
        %s1375 = sand.u32 %s215, 1
        %s1376 = scalar_lea.sflag [#allocation8], %s1375
        %s1377 = sand.u32 %s215, 1
        %s1378 = smul.addr %s1377, 64
        %s1379 = scalar_lea.vmem [#allocation12], %s1378
        // Predicated region
        $region65: #{tpu_custom_call.1} parent=43 // pred_check
          %p1380 = pneg %p225
        $region66: #{tpu_custom_call.1} parent=43 // pred_check_branch
          %1382 = sbr.rel (%p1380) target = $region68
        $region67: #{tpu_custom_call.1} parent=43 // pred_region
          %s1383 = smul.u32 2, %s33
          %1385 = vsyncadd %s1376, 0
          %s1386 = smul.addr %s32, 8
          %s1387 = sadd.s32 %s1383, %s1386
          %s1388 = smul.addr %s1387, 8
          %s1389 = scalar_lea.hbm %s6, %s1388
          %s1390 = sshll.u32 %s1379, 4
          %s1391 = int_to_ptr.vmem [resolvable:$true] %s1390
          %s1392 = sshll.u32 %s1389, 4
          %s1393 = int_to_ptr.hbm [resolvable:$true] %s1392
          %1398 = dma.vmem_to_hbm [thread:$0]  %s1391, 1024, %s1393, %s1376, 256, 256, 16
        $region68: #{tpu_custom_call.1} parent=43 // pred_fallthru
          _
      $region44: #{tpu_custom_call.1} parent=5 // pred_fallthru
        _
      %p1399 = scmp.le.s32.totalorder 2, %s22
      // Predicated region
      $region69: #{tpu_custom_call.1} parent=5 // pred_check
        %p1400 = pneg %p1399
      $region70: #{tpu_custom_call.1} parent=5 // pred_check_branch
        %1402 = sbr.rel (%p1400) target = $region72
      $region71: #{tpu_custom_call.1} parent=5 // pred_region
        %s1403 = ssub.s32 %s22, 2
        // Predicated region
        $region73: #{tpu_custom_call.1} parent=71 // pred_check
          %p1404 = pneg %p231
        $region74: #{tpu_custom_call.1} parent=71 // pred_check_branch
          %1406 = sbr.rel (%p1404) target = $region76
        $region75: #{tpu_custom_call.1} parent=71 // pred_region
          %s1407 = sand.u32 %s216, 1
          %s1408 = scalar_lea.sflag [#allocation8], %s1407
          %s1409 = sand.u32 %s216, 1
          %s1410 = smul.addr %s1409, 64
          %s1411 = scalar_lea.vmem [#allocation12], %s1410
          %1413 = dma.done %s1408, 1024
        $region76: #{tpu_custom_call.1} parent=71 // pred_fallthru
          _
      $region72: #{tpu_custom_call.1} parent=5 // pred_fallthru
        _
    $region6: #{tpu_custom_call.1} parent=1 // loop_footer
      %s26 = sadd.s32 1, %s22
    $region7: #{tpu_custom_call.1} parent=1 // loop_footer_branch
      %21 = sbr.rel target = $region3
    $region8: #{tpu_custom_call.1} parent=1 // loop_exit
      _
    %1414 = vsyncpa [#allocation7], 1
    %s1415 = scalar_lea.sflag [#allocation7], 1
    %1416 = vsyncpa %s1415, 1
    %1417 = vsyncpa [#allocation10], 1
    %s1418 = scalar_lea.sflag [#allocation10], 1
    %1419 = vsyncpa %s1418, 1
    %1420 = vsyncpa [#allocation8], 1
    %s1421 = scalar_lea.sflag [#allocation8], 1
    %1422 = vsyncpa %s1421, 1

</llo_original>
